<compile_context>
chip_gen: v7x
topology: tpu7x:2x2x1
jax: 0.10.0
libtpu: 0.0.40
codegen_flags: <defaults>
</compile_context>

<pallas_src>
import functools

import jax
import jax.numpy as jnp
import numpy as np
from jax import lax
from jax.experimental import pallas as pl
from jax.experimental.pallas import tpu as pltpu

REG_MAX = 16
_VMEM_LIMIT = 32 * 1024 * 1024   # explicit scoped-VMEM budget (safe on v5e/v6e/v7x)


def _pick_row_tile(H):
    for t in (8, 4, 2, 1):
        if H % t == 0:
            return t
    return H


# -----------------------------------------------------------------------------
# Pallas kernel 1: 3x3 conv (stride 1, autopad) + folded-BN bias + optional SiLU
# One fat-K matmul per (batch, row-tile) grid step; optionally two fused output
# branches (cv2/cv3 first convs share the input read).
# -----------------------------------------------------------------------------
def _conv3x3_kernel(x_ref, w_ref, b_ref, *o_refs, couts, silu):
    """x_ref: (Hp, Wp, Cin) padded input (resident per batch element)
       w_ref: (9*Cin, sum(couts)) weight slab, tap-major (dy, dx, cin)
       b_ref: (1, sum(couts)); o_refs: per-branch (TH, W, cout_k) row tiles."""
    TH, W = o_refs[0].shape[0], o_refs[0].shape[1]
    Cin = x_ref.shape[-1]
    row0 = pl.multiple_of(pl.program_id(1) * TH, TH)

    # Load the TH+2 halo rows once, then im2col the 9 taps into a single
    # (TH*W, 9*Cin) patch matrix -> one fat-K MXU matmul instead of 9 tiny ones.
    rows = x_ref[pl.ds(row0, TH + 2)]                  # (TH+2, Wp, Cin)
    taps = []
    for dy in range(3):
        xr = rows[dy:dy + TH]                          # (TH, Wp, Cin)
        for dx in range(3):
            taps.append(xr[:, dx:dx + W, :])           # (TH, W, Cin)
    patches = jnp.concatenate(taps, axis=-1).reshape(TH * W, 9 * Cin)

    acc = jnp.dot(patches, w_ref[...], preferred_element_type=jnp.float32)
    acc = acc + b_ref[...]                             # (1, Ctot) broadcast
    if silu:
        acc = acc * jax.nn.sigmoid(acc)                # SiLU

    off = 0
    for o_ref, c in zip(o_refs, couts):
        o_ref[...] = acc[:, off:off + c].reshape(TH, W, c).astype(o_ref.dtype)
        off += c


def conv3x3_pallas(xp, w_flat, b, *, couts, row_tile, silu):
    """xp: (B, Hp, Wp, Cin) padded NHWC; w_flat: (9*Cin, sum(couts)); b: (sum(couts),)."""
    B, Hp, Wp, Cin = xp.shape
    H, W = Hp - 2, Wp - 2
    Ctot = sum(couts)
    nT = H // row_tile
    kernel = functools.partial(_conv3x3_kernel, couts=tuple(couts), silu=silu)
    out_shape = tuple(jax.ShapeDtypeStruct((B, H, W, c), jnp.float32) for c in couts)
    out_specs = tuple(
        pl.BlockSpec((None, row_tile, W, c), lambda bi, ri: (bi, ri, 0, 0))
        for c in couts)
    outs = pl.pallas_call(
        kernel,
        out_shape=out_shape,
        grid=(B, nT),
        in_specs=[
            # Whole padded image resident per batch element; row tiles are cut
            # with pl.ds inside the kernel (halo handled without re-DMA).
            # TODO(synk): for production-size feature maps switch this input to
            # halo'd row-tile blocks (Element index_map / manual DMA) so the
            # per-buffer VMEM footprint stays bounded on v7x (64 MiB VMEM).
            pl.BlockSpec((None, Hp, Wp, Cin), lambda bi, ri: (bi, 0, 0, 0)),
            pl.BlockSpec((9 * Cin, Ctot), lambda bi, ri: (0, 0)),
            pl.BlockSpec((1, Ctot), lambda bi, ri: (0, 0)),
        ],
        out_specs=out_specs,
        compiler_params=pltpu.CompilerParams(
            dimension_semantics=("parallel", "parallel"),
            vmem_limit_bytes=_VMEM_LIMIT),
    )(xp, w_flat, b.reshape(1, Ctot))
    return outs if isinstance(outs, (list, tuple)) else (outs,)


# -----------------------------------------------------------------------------
# Pallas kernel 2: fused final 1x1 convs (box + cls branches) emitting the
# channel-major, lane-dense (no, H*W) slab -- i.e. exactly the x_cat layout.
# -----------------------------------------------------------------------------
def _conv1x1_pair_kernel(y2_ref, y3_ref, w2_ref, b2_ref, w3_ref, b3_ref, o_ref, *, nbox):
    TH, W, c2 = y2_ref.shape
    c3 = y3_ref.shape[-1]
    sp = TH * W
    y2 = y2_ref[...].reshape(sp, c2)
    y3 = y3_ref[...].reshape(sp, c3)
    # (Cout, Cin) x (sp, Cin)^T -> (Cout, sp): the lane axis is the spatial axis
    # (a multiple of 128) -> unmasked lane-dense stores, and no transpose/reshape
    # is needed downstream.
    dn = (((1,), (1,)), ((), ()))
    box = lax.dot_general(w2_ref[...], y2, dn,
                          preferred_element_type=jnp.float32) + b2_ref[...]
    cls = lax.dot_general(w3_ref[...], y3, dn,
                          preferred_element_type=jnp.float32) + b3_ref[...]
    o_ref[:nbox, :] = box.astype(o_ref.dtype)
    o_ref[nbox:, :] = cls.astype(o_ref.dtype)


def conv1x1_pair_pallas(y2, y3, w2, b2, w3, b3, *, row_tile):
    """y2: (B,H,W,c2), y3: (B,H,W,c3); w2: (4*reg_max, c2); w3: (nc, c3)."""
    B, H, W, c2 = y2.shape
    c3 = y3.shape[-1]
    nbox, nc_ = w2.shape[0], w3.shape[0]
    no = nbox + nc_
    nT = H // row_tile
    sp = row_tile * W
    kernel = functools.partial(_conv1x1_pair_kernel, nbox=nbox)
    return pl.pallas_call(
        kernel,
        out_shape=jax.ShapeDtypeStruct((B, no, H * W), jnp.float32),
        grid=(B, nT),
        in_specs=[
            pl.BlockSpec((None, row_tile, W, c2), lambda bi, ri: (bi, ri, 0, 0)),
            pl.BlockSpec((None, row_tile, W, c3), lambda bi, ri: (bi, ri, 0, 0)),
            pl.BlockSpec((nbox, c2), lambda bi, ri: (0, 0)),
            pl.BlockSpec((nbox, 1), lambda bi, ri: (0, 0)),
            pl.BlockSpec((nc_, c3), lambda bi, ri: (0, 0)),
            pl.BlockSpec((nc_, 1), lambda bi, ri: (0, 0)),
        ],
        out_specs=pl.BlockSpec((None, no, sp), lambda bi, ri: (bi, 0, ri)),
        compiler_params=pltpu.CompilerParams(
            dimension_semantics=("parallel", "parallel"),
            vmem_limit_bytes=_VMEM_LIMIT),
    )(y2, y3, w2, b2, w3, b3)


# -----------------------------------------------------------------------------
# Pallas kernel 3: detection head = DFL (softmax expectation over reg_max bins)
# + dist2bbox (xywh) + stride scaling + class sigmoid, tiled over the anchor axis.
# -----------------------------------------------------------------------------
def _head_kernel(x_ref, anc_ref, str_ref, o_ref, *, reg_max):
    xc = x_ref[...]                        # (no, TA)
    nbox = 4 * reg_max
    box = xc[:nbox, :]                     # (4*reg_max, TA)
    cls = xc[nbox:, :]                     # (nc, TA)
    ta = box.shape[-1]

    # DFL: softmax over reg_max bins, then expectation with arange weights
    b3 = box.reshape(4, reg_max, ta)
    m = jnp.max(b3, axis=1, keepdims=True)
    e = jnp.exp(b3 - m)
    p = e / jnp.sum(e, axis=1, keepdims=True)
    bins = lax.broadcasted_iota(jnp.float32, (4, reg_max, ta), 1)
    dist = jnp.sum(p * bins, axis=1)       # (4, TA)

    # dist2bbox (xywh=True) + stride scaling; results stored directly
    anc = anc_ref[...]                     # (2, TA)
    lt, rb = dist[:2, :], dist[2:, :]
    x1y1 = anc - lt
    x2y2 = anc + rb
    c_xy = (x1y1 + x2y2) * 0.5
    wh = x2y2 - x1y1
    strv = str_ref[...]                    # (1, TA)
    o_ref[:4, :] = (jnp.concatenate([c_xy, wh], axis=0) * strv).astype(o_ref.dtype)
    o_ref[4:, :] = jax.nn.sigmoid(cls).astype(o_ref.dtype)


def head_pallas(x_cat, anchors, stride_t, nc):
    B, no, A = x_cat.shape
    TA = A
    for cand in (512, 256, 128):           # largest lane-aligned tile dividing A
        if A % cand == 0:
            TA = cand
            break
    kernel = functools.partial(_head_kernel, reg_max=REG_MAX)
    return pl.pallas_call(
        kernel,
        out_shape=jax.ShapeDtypeStruct((B, 4 + nc, A), jnp.float32),
        grid=(B, A // TA),
        in_specs=[
            pl.BlockSpec((None, no, TA), lambda bi, ti: (bi, 0, ti)),
            pl.BlockSpec((2, TA), lambda bi, ti: (0, ti)),
            pl.BlockSpec((1, TA), lambda bi, ti: (0, ti)),
        ],
        out_specs=pl.BlockSpec((None, 4 + nc, TA), lambda bi, ti: (bi, 0, ti)),
        compiler_params=pltpu.CompilerParams(
            dimension_semantics=("parallel", "parallel"),
            vmem_limit_bytes=_VMEM_LIMIT),
    )(x_cat, anchors, stride_t)


# -----------------------------------------------------------------------------
# Glue: anchors, parameter init (deterministic, BN folded), full forward.
# -----------------------------------------------------------------------------
def make_anchors_jax(hw_list, strides, offset=0.5):
    aps, sts = [], []
    for (h, w), s in zip(hw_list, strides):
        sx = jnp.arange(w, dtype=jnp.float32) + offset
        sy = jnp.arange(h, dtype=jnp.float32) + offset
        syg, sxg = jnp.meshgrid(sy, sx, indexing="ij")
        aps.append(jnp.stack([sxg, syg], axis=-1).reshape(-1, 2))
        sts.append(jnp.full((h * w, 1), s, dtype=jnp.float32))
    anchors = jnp.concatenate(aps, axis=0).T    # (2, A)
    stride_t = jnp.concatenate(sts, axis=0).T   # (1, A)
    return anchors, stride_t


def init_params(key, nc, ch):
    c2 = max(16, ch[0] // 4, 4 * REG_MAX)
    c3 = max(ch[0], min(nc, 100))

    def conv_bn(k, cin, cout, ksz):
        kw, kg, kb, km, kv = jax.random.split(k, 5)
        w = jax.random.normal(kw, (ksz, ksz, cin, cout), jnp.float32) * 0.1
        gamma = 1.0 + 0.1 * jax.random.normal(kg, (cout,), jnp.float32)
        beta = 0.1 * jax.random.normal(kb, (cout,), jnp.float32)
        mean = 0.1 * jax.random.normal(km, (cout,), jnp.float32)
        var = 0.5 + 0.1 * jnp.abs(jax.random.normal(kv, (cout,), jnp.float32))
        scale = gamma / jnp.sqrt(var + 1e-5)      # fold BN (eval mode) into conv
        return w * scale, beta - mean * scale

    def conv_bias(k, cin, cout):
        kw, kb = jax.random.split(k)
        w = jax.random.normal(kw, (1, 1, cin, cout), jnp.float32) * 0.1
        b = 0.1 * jax.random.normal(kb, (cout,), jnp.float32)
        return w, b

    params = {"cv2": [], "cv3": []}
    keys = iter(jax.random.split(key, 6 * len(ch)))
    for cin in ch:
        w1, b1 = conv_bn(next(keys), cin, c2, 3)
        w2, b2 = conv_bn(next(keys), c2, c2, 3)
        w3, b3 = conv_bias(next(keys), c2, 4 * REG_MAX)
        params["cv2"].append([(w1, b1, True), (w2, b2, True), (w3, b3, False)])
        w1, b1 = conv_bn(next(keys), cin, c3, 3)
        w2, b2 = conv_bn(next(keys), c3, c3, 3)
        w3, b3 = conv_bias(next(keys), c3, nc)
        params["cv3"].append([(w1, b1, True), (w2, b2, True), (w3, b3, False)])
    return params


def detect_forward(xs_nchw, params, strides, nc):
    nbox = 4 * REG_MAX
    no = nbox + nc
    B = xs_nchw[0].shape[0]
    feats_flat, hw = [], []
    for i, x in enumerate(xs_nchw):
        _, Cin, H, W = x.shape
        hw.append((H, W))
        row_tile = _pick_row_tile(H)

        (w2a, b2a, _), (w2b, b2b, _), (w2c, b2c, _) = params["cv2"][i]
        (w3a, b3a, _), (w3b, b3b, _), (w3c, b3c, _) = params["cv3"][i]
        c2, c3 = w2a.shape[-1], w3a.shape[-1]

        # single NCHW->NHWC transpose + single zero-pad of the level input
        xh = jnp.transpose(x, (0, 2, 3, 1))
        xp = jnp.pad(xh, ((0, 0), (1, 1), (1, 1), (0, 0)))

        # fused first 3x3 convs of both branches (input feature map read once)
        w1 = jnp.concatenate([w2a, w3a], axis=-1).reshape(9 * Cin, c2 + c3)
        b1 = jnp.concatenate([b2a, b3a], axis=0)
        y2a, y3a = conv3x3_pallas(xp, w1, b1, couts=(c2, c3),
                                  row_tile=row_tile, silu=True)

        # second 3x3 conv of each branch (each intermediate padded exactly once)
        (y2b,) = conv3x3_pallas(jnp.pad(y2a, ((0, 0), (1, 1), (1, 1), (0, 0))),
                                w2b.reshape(9 * c2, c2), b2b, couts=(c2,),
                                row_tile=row_tile, silu=True)
        (y3b,) = conv3x3_pallas(jnp.pad(y3a, ((0, 0), (1, 1), (1, 1), (0, 0))),
                                w3b.reshape(9 * c3, c3), b3b, couts=(c3,),
                                row_tile=row_tile, silu=True)

        # fused final 1x1 convs -> lane-dense (B, no, H*W) slab (== x_cat slab)
        lvl = conv1x1_pair_pallas(
            y2b, y3b,
            w2c.reshape(c2, nbox).T, b2c.reshape(nbox, 1),
            w3c.reshape(c3, nc).T, b3c.reshape(nc, 1),
            row_tile=row_tile)
        feats_flat.append(lvl)                              # (B, no, H*W)

    x_cat = jnp.concatenate(feats_flat, axis=-1)            # (B, no, A)
    anchors, stride_t = make_anchors_jax(hw, strides)
    y = head_pallas(x_cat, anchors, stride_t, nc)
    # per-level NCHW feature maps (as PyTorch returns them) = free reshape
    x_out = [f.reshape(B, no, h, w) for f, (h, w) in zip(feats_flat, hw)]
    return y, x_out


# --------------------------- pure-JAX reference ------------------------------
def _conv2d_ref(x, w, b, silu):
    y = lax.conv_general_dilated(x, w, (1, 1), "SAME",
                                 dimension_numbers=("NHWC", "HWIO", "NHWC"))
    y = y + b.reshape(1, 1, 1, -1)
    return y * jax.nn.sigmoid(y) if silu else y


def detect_forward_ref(xs_nchw, params, strides, nc):
    no = 4 * REG_MAX + nc
    B = xs_nchw[0].shape[0]
    feats = []
    for i, x in enumerate(xs_nchw):
        xh = jnp.transpose(x, (0, 2, 3, 1))
        a = xh
        for (w, b, silu) in params["cv2"][i]:
            a = _conv2d_ref(a, w, b, silu)
        c = xh
        for (w, b, silu) in params["cv3"][i]:
            c = _conv2d_ref(c, w, b, silu)
        feats.append(jnp.concatenate([a, c], axis=-1))
    x_cat = jnp.concatenate(
        [jnp.transpose(f, (0, 3, 1, 2)).reshape(B, no, -1) for f in feats], axis=-1)
    hw = [(f.shape[1], f.shape[2]) for f in feats]
    anchors, stride_t = make_anchors_jax(hw, strides)
    A = x_cat.shape[-1]
    box, cls = x_cat[:, :4 * REG_MAX, :], x_cat[:, 4 * REG_MAX:, :]
    p = jax.nn.softmax(box.reshape(B, 4, REG_MAX, A), axis=2)
    dist = jnp.sum(p * jnp.arange(REG_MAX, dtype=jnp.float32).reshape(1, 1, REG_MAX, 1), axis=2)
    lt, rb = dist[:, :2, :], dist[:, 2:, :]
    anc = anchors[None]
    x1y1, x2y2 = anc - lt, anc + rb
    dbox = jnp.concatenate([(x1y1 + x2y2) * 0.5, x2y2 - x1y1], axis=1) * stride_t
    y = jnp.concatenate([dbox, jax.nn.sigmoid(cls)], axis=1)
    return y, [jnp.transpose(f, (0, 3, 1, 2)) for f in feats]


if __name__ == "__main__":
    key = jax.random.PRNGKey(0)
    nc = 8                        # small class count for the demo
    ch = (16, 32)                 # per-level input channels
    spatial = [(32, 32), (16, 16)]
    strides = [8.0, 16.0]         # self.stride is normally set by model build
    B = 2

    kp, k0, k1 = jax.random.split(key, 3)
    params = init_params(kp, nc, ch)
    xs = [jax.random.normal(k0, (B, ch[0], spatial[0][0], spatial[0][1]), jnp.float32),
          jax.random.normal(k1, (B, ch[1], spatial[1][0], spatial[1][1]), jnp.float32)]

    y, feats = detect_forward(xs, params, strides, nc)
    y = jax.block_until_ready(y)
    feats = [jax.block_until_ready(f) for f in feats]

    y_ref, feats_ref = detect_forward_ref(xs, params, strides, nc)
    np.testing.assert_allclose(np.asarray(y), np.asarray(y_ref), rtol=2e-3, atol=2e-3)
    for f, fr in zip(feats, feats_ref):
        np.testing.assert_allclose(np.asarray(f), np.asarray(fr), rtol=2e-3, atol=2e-3)

    print("KERNEL_OK")
</pallas_src>

<mosaic_0001>
module attributes {stable_mosaic.version = 11 : i64} {
  func.func @_conv3x3_kernel(%arg0: i32, %arg1: i32, %arg2: memref<1x34x34x16xf32, #tpu.memory_space<vmem>>, %arg3: memref<144x80xf32, #tpu.memory_space<vmem>>, %arg4: memref<1x80xf32, #tpu.memory_space<vmem>>, %arg5: memref<1x8x32x64xf32, #tpu.memory_space<vmem>>, %arg6: memref<1x8x32x16xf32, #tpu.memory_space<vmem>>) attributes {dimension_semantics = [#tpu.dimension_semantics<parallel>, #tpu.dimension_semantics<parallel>], iteration_bounds = array<i64: 2, 4>, scalar_prefetch = 0 : i64, scratch_operands = 0 : i64, tpu.core_type = #tpu.core_type<tc>, window_params = [{transform_indices = @transform_0, window_bounds = array<i64: 1, 34, 34, 16>}, {pipeline_mode = #tpu.pipeline_mode<synchronous>, transform_indices = @transform_1, window_bounds = array<i64: 144, 80>}, {pipeline_mode = #tpu.pipeline_mode<synchronous>, transform_indices = @transform_2, window_bounds = array<i64: 1, 80>}, {transform_indices = @transform_3, window_bounds = array<i64: 1, 8, 32, 64>}, {transform_indices = @transform_4, window_bounds = array<i64: 1, 8, 32, 16>}]} {
    %c8_i32 = arith.constant 8 : i32
    %0 = arith.muli %arg1, %c8_i32 : i32
    %1 = tpu.assume_multiple %0, 8 : i32
    %c0 = arith.constant 0 : index
    %2 = arith.index_cast %1 : i32 to index
    %c0_0 = arith.constant 0 : index
    %c0_1 = arith.constant 0 : index
    %3 = vector.load %arg2[%c0, %2, %c0_0, %c0_1] : memref<1x34x34x16xf32, #tpu.memory_space<vmem>>, vector<1x10x34x16xf32>
    %4 = vector.shape_cast %3 : vector<1x10x34x16xf32> to vector<10x34x16xf32>
    %5 = vector.extract_strided_slice %4 {offsets = [0, 0, 0], sizes = [8, 34, 16], strides = [1, 1, 1]} : vector<10x34x16xf32> to vector<8x34x16xf32>
    %6 = vector.extract_strided_slice %5 {offsets = [0, 0, 0], sizes = [8, 32, 16], strides = [1, 1, 1]} : vector<8x34x16xf32> to vector<8x32x16xf32>
    %7 = vector.extract_strided_slice %5 {offsets = [0, 1, 0], sizes = [8, 32, 16], strides = [1, 1, 1]} : vector<8x34x16xf32> to vector<8x32x16xf32>
    %8 = vector.extract_strided_slice %5 {offsets = [0, 2, 0], sizes = [8, 32, 16], strides = [1, 1, 1]} : vector<8x34x16xf32> to vector<8x32x16xf32>
    %9 = vector.extract_strided_slice %4 {offsets = [1, 0, 0], sizes = [8, 34, 16], strides = [1, 1, 1]} : vector<10x34x16xf32> to vector<8x34x16xf32>
    %10 = vector.extract_strided_slice %9 {offsets = [0, 0, 0], sizes = [8, 32, 16], strides = [1, 1, 1]} : vector<8x34x16xf32> to vector<8x32x16xf32>
    %11 = vector.extract_strided_slice %9 {offsets = [0, 1, 0], sizes = [8, 32, 16], strides = [1, 1, 1]} : vector<8x34x16xf32> to vector<8x32x16xf32>
    %12 = vector.extract_strided_slice %9 {offsets = [0, 2, 0], sizes = [8, 32, 16], strides = [1, 1, 1]} : vector<8x34x16xf32> to vector<8x32x16xf32>
    %13 = vector.extract_strided_slice %4 {offsets = [2, 0, 0], sizes = [8, 34, 16], strides = [1, 1, 1]} : vector<10x34x16xf32> to vector<8x34x16xf32>
    %14 = vector.extract_strided_slice %13 {offsets = [0, 0, 0], sizes = [8, 32, 16], strides = [1, 1, 1]} : vector<8x34x16xf32> to vector<8x32x16xf32>
    %15 = vector.extract_strided_slice %13 {offsets = [0, 1, 0], sizes = [8, 32, 16], strides = [1, 1, 1]} : vector<8x34x16xf32> to vector<8x32x16xf32>
    %16 = vector.extract_strided_slice %13 {offsets = [0, 2, 0], sizes = [8, 32, 16], strides = [1, 1, 1]} : vector<8x34x16xf32> to vector<8x32x16xf32>
    %17 = tpu.concatenate %6, %7, %8, %10, %11, %12, %14, %15, %16 in 2 : vector<8x32x16xf32>, vector<8x32x16xf32>, vector<8x32x16xf32>, vector<8x32x16xf32>, vector<8x32x16xf32>, vector<8x32x16xf32>, vector<8x32x16xf32>, vector<8x32x16xf32>, vector<8x32x16xf32> -> vector<8x32x144xf32>
    %18 = vector.shape_cast %17 : vector<8x32x144xf32> to vector<256x144xf32>
    %c0_2 = arith.constant 0 : index
    %c0_3 = arith.constant 0 : index
    %19 = vector.load %arg3[%c0_2, %c0_3] : memref<144x80xf32, #tpu.memory_space<vmem>>, vector<144x80xf32>
    %cst = arith.constant dense<0.000000e+00> : vector<256x80xf32>
    %20 = tpu.matmul %18, %19, %cst {dimension_numbers = #tpu.dot_dimension_numbers<[1], [0], [0], [1], [0, 0, 1, 1], [], []>} : vector<256x144xf32>, vector<144x80xf32>, vector<256x80xf32> -> vector<256x80xf32>
    %c0_4 = arith.constant 0 : index
    %c0_5 = arith.constant 0 : index
    %21 = vector.load %arg4[%c0_4, %c0_5] : memref<1x80xf32, #tpu.memory_space<vmem>>, vector<1x80xf32>
    %22 = vector.broadcast %21 : vector<1x80xf32> to vector<256x80xf32>
    %23 = arith.addf %20, %22 : vector<256x80xf32>
    %24 = arith.negf %23 : vector<256x80xf32>
    %25 = math.exp %24 : vector<256x80xf32>
    %cst_6 = arith.constant 1.000000e+00 : f32
    %26 = vector.broadcast %cst_6 : f32 to vector<256x80xf32>
    %27 = arith.addf %26, %25 : vector<256x80xf32>
    %28 = arith.divf %26, %27 : vector<256x80xf32>
    %29 = arith.mulf %23, %28 : vector<256x80xf32>
    %30 = vector.extract_strided_slice %29 {offsets = [0, 0], sizes = [256, 64], strides = [1, 1]} : vector<256x80xf32> to vector<256x64xf32>
    %31 = vector.shape_cast %30 : vector<256x64xf32> to vector<8x32x64xf32>
    %c0_7 = arith.constant 0 : index
    %c0_8 = arith.constant 0 : index
    %c0_9 = arith.constant 0 : index
    %c0_10 = arith.constant 0 : index
    %32 = vector.load %arg5[%c0_7, %c0_8, %c0_9, %c0_10] : memref<1x8x32x64xf32, #tpu.memory_space<vmem>>, vector<1x8x32x64xf32>
    %33 = vector.shape_cast %32 : vector<1x8x32x64xf32> to vector<8x32x64xf32>
    %34 = vector.shape_cast %31 : vector<8x32x64xf32> to vector<1x8x32x64xf32>
    tpu.vector_store %arg5[%c0_7, %c0_8, %c0_9, %c0_10], %34 {strides = array<i32>} : memref<1x8x32x64xf32, #tpu.memory_space<vmem>>, vector<1x8x32x64xf32>,
    %35 = vector.extract_strided_slice %29 {offsets = [0, 64], sizes = [256, 16], strides = [1, 1]} : vector<256x80xf32> to vector<256x16xf32>
    %36 = vector.shape_cast %35 : vector<256x16xf32> to vector<8x32x16xf32>
    %c0_11 = arith.constant 0 : index
    %c0_12 = arith.constant 0 : index
    %c0_13 = arith.constant 0 : index
    %c0_14 = arith.constant 0 : index
    %37 = vector.load %arg6[%c0_11, %c0_12, %c0_13, %c0_14] : memref<1x8x32x16xf32, #tpu.memory_space<vmem>>, vector<1x8x32x16xf32>
    %38 = vector.shape_cast %37 : vector<1x8x32x16xf32> to vector<8x32x16xf32>
    %39 = vector.shape_cast %36 : vector<8x32x16xf32> to vector<1x8x32x16xf32>
    tpu.vector_store %arg6[%c0_11, %c0_12, %c0_13, %c0_14], %39 {strides = array<i32>} : memref<1x8x32x16xf32, #tpu.memory_space<vmem>>, vector<1x8x32x16xf32>,
    return
  }
  func.func @transform_0(%arg0: i32, %arg1: i32) -> (i32, i32, i32, i32) {
    %c0_i32 = arith.constant 0 : i32
    %c0_i32_0 = arith.constant 0 : i32
    %c0_i32_1 = arith.constant 0 : i32
    %c0_i32_2 = arith.constant 0 : i32
    return %arg0, %c0_i32, %c0_i32_0, %c0_i32_1 : i32, i32, i32, i32
  }
  func.func @transform_1(%arg0: i32, %arg1: i32) -> (i32, i32) {
    %c0_i32 = arith.constant 0 : i32
    %c0_i32_0 = arith.constant 0 : i32
    %c0_i32_1 = arith.constant 0 : i32
    return %c0_i32, %c0_i32_0 : i32, i32
  }
  func.func @transform_2(%arg0: i32, %arg1: i32) -> (i32, i32) {
    %c0_i32 = arith.constant 0 : i32
    %c0_i32_0 = arith.constant 0 : i32
    %c0_i32_1 = arith.constant 0 : i32
    return %c0_i32, %c0_i32_0 : i32, i32
  }
  func.func @transform_3(%arg0: i32, %arg1: i32) -> (i32, i32, i32, i32) {
    %c0_i32 = arith.constant 0 : i32
    %c0_i32_0 = arith.constant 0 : i32
    %c0_i32_1 = arith.constant 0 : i32
    return %arg0, %arg1, %c0_i32, %c0_i32_0 : i32, i32, i32, i32
  }
  func.func @transform_4(%arg0: i32, %arg1: i32) -> (i32, i32, i32, i32) {
    %c0_i32 = arith.constant 0 : i32
    %c0_i32_0 = arith.constant 0 : i32
    %c0_i32_1 = arith.constant 0 : i32
    return %arg0, %arg1, %c0_i32, %c0_i32_0 : i32, i32, i32, i32
  }
}

</mosaic_0001>

<llo_original>
// kernel: tpu_custom_call.1
$region0: #{tpu_custom_call.1}
  #allocation0 [shape = 'u32[]', space=smem, size = 0x4, offset = 0x4, fixed_abs, tag = 'smem constant byte address 0x4 - core index']
  #allocation1 [shape = 'u32[144,128]{1,0:T(1,128)}', space=vmem, size = 0x12000, scoped, tag = 'internal scratch']
  %s0 = inlined_call_operand.vmem [shape: f32[2,34,34,16], index: 0, kind: input, shape index: {}]
  %s1 = inlined_call_operand.vmem [shape: f32[144,80], index: 1, kind: input, shape index: {}]
  %s2 = inlined_call_operand.vmem [shape: f32[1,80], index: 2, kind: input, shape index: {}]
  %s3 = inlined_call_operand.hbm [shape: f32[2,32,32,64], index: 3, kind: output, shape index: {0}]
  %s4 = inlined_call_operand.vmem [shape: f32[2,32,32,16], index: 4, kind: output, shape index: {1}]
  %5 = xla_tuple %s3, %s4
  %s6 = sld [smem:[#allocation0]]
  $region53: #{tpu_custom_call.1} parent=0
    _
  %s8 = ssub.s32 1, %s6
  %s9 = scalar_select 0, %s8, %s6
  $region1: #{tpu_custom_call.1} parent=0
    #allocation2 [shape = 'u8[262144]{0}', space=vmem, size = 0x40000, scoped, tag = 'output window, operand 0']
    #allocation3 [shape = 's32[2]{0}', space=sflag, size = 0x8, scoped, tag = 'scoped memory for tpu_custom_call.1']
    %10 = vsyncpa [#allocation3], 0
    %s11 = scalar_lea.sflag [#allocation3], 1
    %12 = vsyncpa %s11, 0
    loop: start=0, step=1, limit=10
    $region2: #{tpu_custom_call.1} parent=1 // loop_pre_header
      _
    $region3: #{tpu_custom_call.1} parent=1 // loop_header
      %s14 = sphi 0, %s18
      %p15 = scmp.ge.s32.totalorder %s14, 10
      %s21 = sphi 0, %s33
      %s22 = sphi 0, %s29
      %s23 = sphi 0, %s21
      %s24 = sphi 0, %s22
      %s25 = sphi 0, %s23
      %s26 = sphi 0, %s24
      %s36 = sphi 0, %s38
      %s39 = sphi 0, %s36
      %s40 = sphi 0, %s39
      %s56 = sphi 0, %s40
      %s60 = sphi 0, %s60
      %s62 = sphi 0, %s60
      %s63 = sphi 0, %s62
      %s77 = sphi 0, %s63
      %s81 = sphi 0, %s81
      %s83 = sphi 0, %s81
      %s84 = sphi 0, %s83
      %s98 = sphi 0, %s84
      %s106 = sphi 0, %s108
      %s109 = sphi 0, %s106
      %s110 = sphi 0, %s109
      %s126 = sphi 0, %s110
      %s134 = sphi 0, %s136
      %s137 = sphi 0, %s134
      %s138 = sphi 0, %s137
      %s154 = sphi 0, %s138
    $region4: #{tpu_custom_call.1} parent=1 // loop_header_branch
      %17 = sbr.rel (%p15) target = $region8
    $region5: #{tpu_custom_call.1} parent=1 // loop_body
      %s19 = ssub.s32 %s14, 1
      %s20 = ssub.s32 %s14, 2
      %s27 = sadd.s32 1, %s22
      %p28 = scmp.ge.s32.totalorder %s27, 4
      %s29 = scalar_select %p28, 0, %s27
      %s30 = sadd.s32 1, %s21
      %s31 = scalar_select %p28, %s30, %s21
      %p32 = scmp.ge.s32.totalorder %s31, 2
      %s33 = scalar_select %p32, 0, %s31
      %s34 = ssub.s32 %s21, %s33
      %p35 = scmp.eq.s32.totalorder %s34, 0
      %s37 = sadd.s32 %s36, 1
      %s38 = scalar_select %p35, %s36, %s37
      %p41 = pneg %p35
      %p42 = scmp.eq.s32.totalorder %s14, 7
      %p43 = por %p41, %p42
      %p44 = scmp.ne.s32.totalorder %s36, %s39
      %p45 = scmp.eq.s32.totalorder %s14, 0
      %p46 = por %p44, %p45
      %p47 = scmp.ne.s32.totalorder %s36, %s39
      %p48 = scmp.eq.s32.totalorder %s19, 7
      %p49 = por %p47, %p48
      %p50 = scmp.ne.s32.totalorder %s39, %s40
      %p51 = scmp.eq.s32.totalorder %s19, 0
      %p52 = por %p50, %p51
      %p53 = scmp.ne.s32.totalorder %s39, %s40
      %p54 = scmp.eq.s32.totalorder %s20, 7
      %p55 = por %p53, %p54
      %p57 = scmp.ne.s32.totalorder %s40, %s56
      %p58 = scmp.eq.s32.totalorder %s20, 0
      %p59 = por %p57, %p58
      %s61 = sadd.s32 %s60, 1
      %p64 = scmp.eq.s32.totalorder %s14, 7
      %p65 = scmp.ne.s32.totalorder %s60, %s62
      %p66 = scmp.eq.s32.totalorder %s14, 0
      %p67 = por %p65, %p66
      %p68 = scmp.ne.s32.totalorder %s60, %s62
      %p69 = scmp.eq.s32.totalorder %s19, 7
      %p70 = por %p68, %p69
      %p71 = scmp.ne.s32.totalorder %s62, %s63
      %p72 = scmp.eq.s32.totalorder %s19, 0
      %p73 = por %p71, %p72
      %p74 = scmp.ne.s32.totalorder %s62, %s63
      %p75 = scmp.eq.s32.totalorder %s20, 7
      %p76 = por %p74, %p75
      %p78 = scmp.ne.s32.totalorder %s63, %s77
      %p79 = scmp.eq.s32.totalorder %s20, 0
      %p80 = por %p78, %p79
      %s82 = sadd.s32 %s81, 1
      %p85 = scmp.eq.s32.totalorder %s14, 7
      %p86 = scmp.ne.s32.totalorder %s81, %s83
      %p87 = scmp.eq.s32.totalorder %s14, 0
      %p88 = por %p86, %p87
      %p89 = scmp.ne.s32.totalorder %s81, %s83
      %p90 = scmp.eq.s32.totalorder %s19, 7
      %p91 = por %p89, %p90
      %p92 = scmp.ne.s32.totalorder %s83, %s84
      %p93 = scmp.eq.s32.totalorder %s19, 0
      %p94 = por %p92, %p93
      %p95 = scmp.ne.s32.totalorder %s83, %s84
      %p96 = scmp.eq.s32.totalorder %s20, 7
      %p97 = por %p95, %p96
      %p99 = scmp.ne.s32.totalorder %s84, %s98
      %p100 = scmp.eq.s32.totalorder %s20, 0
      %p101 = por %p99, %p100
      %s102 = ssub.s32 %s21, %s33
      %s103 = ssub.s32 %s22, %s29
      %s104 = sor.u32 %s102, %s103
      %p105 = scmp.eq.s32.totalorder %s104, 0
      %s107 = sadd.s32 %s106, 1
      %s108 = scalar_select %p105, %s106, %s107
      %p111 = pneg %p105
      %p112 = scmp.eq.s32.totalorder %s14, 7
      %p113 = por %p111, %p112
      %p114 = scmp.ne.s32.totalorder %s106, %s109
      %p115 = scmp.eq.s32.totalorder %s14, 0
      %p116 = por %p114, %p115
      %p117 = scmp.ne.s32.totalorder %s106, %s109
      %p118 = scmp.eq.s32.totalorder %s19, 7
      %p119 = por %p117, %p118
      %p120 = scmp.ne.s32.totalorder %s109, %s110
      %p121 = scmp.eq.s32.totalorder %s19, 0
      %p122 = por %p120, %p121
      %p123 = scmp.ne.s32.totalorder %s109, %s110
      %p124 = scmp.eq.s32.totalorder %s20, 7
      %p125 = por %p123, %p124
      %p127 = scmp.ne.s32.totalorder %s110, %s126
      %p128 = scmp.eq.s32.totalorder %s20, 0
      %p129 = por %p127, %p128
      %s130 = ssub.s32 %s21, %s33
      %s131 = ssub.s32 %s22, %s29
      %s132 = sor.u32 %s130, %s131
      %p133 = scmp.eq.s32.totalorder %s132, 0
      %s135 = sadd.s32 %s134, 1
      %s136 = scalar_select %p133, %s134, %s135
      %p139 = pneg %p133
      %p140 = scmp.eq.s32.totalorder %s14, 7
      %p141 = por %p139, %p140
      %p142 = scmp.ne.s32.totalorder %s134, %s137
      %p143 = scmp.eq.s32.totalorder %s14, 0
      %p144 = por %p142, %p143
      %p145 = scmp.ne.s32.totalorder %s134, %s137
      %p146 = scmp.eq.s32.totalorder %s19, 7
      %p147 = por %p145, %p146
      %p148 = scmp.ne.s32.totalorder %s137, %s138
      %p149 = scmp.eq.s32.totalorder %s19, 0
      %p150 = por %p148, %p149
      %p151 = scmp.ne.s32.totalorder %s137, %s138
      %p152 = scmp.eq.s32.totalorder %s20, 7
      %p153 = por %p151, %p152
      %p155 = scmp.ne.s32.totalorder %s138, %s154
      %p156 = scmp.eq.s32.totalorder %s20, 0
      %p157 = por %p155, %p156
      %p158 = scmp.le.s32.totalorder 1, %s14
      %p159 = scmp.lt.s32.totalorder %s14, 9
      %p160 = pnand %p158, %p159
      %p161 = pneg %p160
      // Predicated region
      $region9: #{tpu_custom_call.1} parent=5 // pred_check
        _
      $region10: #{tpu_custom_call.1} parent=5 // pred_check_branch
        %163 = sbr.rel (%p160) target = $region12
      $region11: #{tpu_custom_call.1} parent=5 // pred_region
        %s164 = ssub.s32 %s14, 1
        // Predicated region
        $region13: #{tpu_custom_call.1} parent=11 // pred_check
          %p165 = pneg %p73
        $region14: #{tpu_custom_call.1} parent=11 // pred_check_branch
          %167 = sbr.rel (%p165) target = $region16
        $region15: #{tpu_custom_call.1} parent=11 // pred_region
          _
        $region16: #{tpu_custom_call.1} parent=11 // pred_fallthru
          _
        // Predicated region
        $region17: #{tpu_custom_call.1} parent=11 // pred_check
          %p168 = pneg %p94
        $region18: #{tpu_custom_call.1} parent=11 // pred_check_branch
          %170 = sbr.rel (%p168) target = $region20
        $region19: #{tpu_custom_call.1} parent=11 // pred_region
          _
        $region20: #{tpu_custom_call.1} parent=11 // pred_fallthru
          _
      $region12: #{tpu_custom_call.1} parent=5 // pred_fallthru
        _
      %p171 = scmp.lt.s32.totalorder %s14, 8
      // Predicated region
      $region21: #{tpu_custom_call.1} parent=5 // pred_check
        %p172 = pneg %p171
      $region22: #{tpu_custom_call.1} parent=5 // pred_check_branch
        %174 = sbr.rel (%p172) target = $region24
      $region23: #{tpu_custom_call.1} parent=5 // pred_region
        // Predicated region
        $region25: #{tpu_custom_call.1} parent=23 // pred_check
          %p175 = pneg %p46
        $region26: #{tpu_custom_call.1} parent=23 // pred_check_branch
          %177 = sbr.rel (%p175) target = $region28
        $region27: #{tpu_custom_call.1} parent=23 // pred_region
          %p178 = scmp.lt.s32.totalorder %s21, 1
          %s179 = scalar_select %p178, %s21, 1
          %s180 = smul.addr %s179, 170
          %s181 = smul.addr %s180, 8
          %s182 = scalar_lea.vmem %s0, %s181
        $region28: #{tpu_custom_call.1} parent=23 // pred_fallthru
          _
      $region24: #{tpu_custom_call.1} parent=5 // pred_fallthru
        _
      %p183 = scmp.le.s32.totalorder 1, %s14
      %p184 = scmp.lt.s32.totalorder %s14, 9
      %p185 = pnand %p183, %p184
      %p186 = pneg %p185
      // Predicated region
      $region29: #{tpu_custom_call.1} parent=5 // pred_check
        _
      $region30: #{tpu_custom_call.1} parent=5 // pred_check_branch
        %188 = sbr.rel (%p185) target = $region32
      $region31: #{tpu_custom_call.1} parent=5 // pred_region
        %s189 = ssub.s32 %s14, 1
        %p190 = scmp.lt.s32.totalorder %s23, 1
        %s191 = scalar_select %p190, %s23, 1
        %s192 = smul.addr %s191, 170
        %s193 = smul.addr %s192, 8
        %s194 = scalar_lea.vmem %s0, %s193
        %p195 = pneg %p52
        %p196 = pneg %p49
        %p197 = pneg %p73
        %p198 = pneg %p70
        %p199 = pneg %p94
        %p200 = pneg %p91
        %p201 = pneg %p122
        %p202 = pneg %p119
        %s203 = sand.u32 %s109, 1
        %s204 = scalar_lea.sflag [#allocation3], %s203
        %s205 = sand.u32 %s109, 1
        %s206 = smul.addr %s205, 256
        %s207 = scalar_lea.vmem [#allocation2], %s206
        %p208 = pneg %p150
        %p209 = pneg %p147
        %s210 = smul.u32 8, %s24
        %p211 = scmp.lt.s32.totalorder %s23, 1
        %s212 = scalar_select %p211, %s23, 1
        %p213 = scmp.lt.s32.totalorder %s210, 31
        %s214 = scalar_select %p213, %s210, 31
        %s215 = smul.addr %s214, 4
        %s216 = smul.addr %s212, 128
        %s217 = sadd.s32 %s215, %s216
        %s218 = smul.addr %s217, 8
        %s219 = scalar_lea.vmem %s4, %s218
        %p220 = scmp.lt.s32.totalorder %s23, 1
        %s221 = scalar_select %p220, %s23, 1
        %s222 = smul.addr %s221, 170
        %s223 = smul.addr %s222, 8
        %s224 = scalar_lea.vmem %s0, %s223
        %s225 = smul.u32 8, %s24
        %s226 = smul.u32 8, %s24
        %p227 = scmp.lt.s32.totalorder %s23, 1
        %s228 = scalar_select %p227, %s23, 1
        %p229 = scmp.lt.s32.totalorder %s226, 31
        %s230 = scalar_select %p229, %s226, 31
        %s231 = smul.addr %s230, 4
        %s232 = smul.addr %s228, 128
        %s233 = sadd.s32 %s231, %s232
        %s234 = smul.addr %s233, 8
        %s235 = scalar_lea.vmem %s4, %s234
        %s236 = smul.u32 8, %s24
        %s237 = smul.u32 %s24, 8
        %s238 = smul.u32 %s237, 40
        %s239 = scalar_lea.vmem %s224, %s238
        %v240 = vld [vmem:[%s239] sm:$0xff]
        %v241 = vld [vmem:[%s239 + $0x8] sm:$0xff]
        %v242 = vld [vmem:[%s239 + $0x10] sm:$0xff]
        %v243 = vld [vmem:[%s239 + $0x18] sm:$0xff]
        %v244 = vld [vmem:[%s239 + $0x20] sm:$0x3]
        %v245 = vld [vmem:[%s239 + $0x28] sm:$0xff]
        %v246 = vld [vmem:[%s239 + $0x30] sm:$0xff]
        %v247 = vld [vmem:[%s239 + $0x38] sm:$0xff]
        %v248 = vld [vmem:[%s239 + $0x40] sm:$0xff]
        %v249 = vld [vmem:[%s239 + $0x48] sm:$0x3]
        %v250 = vld [vmem:[%s239 + $0x50] sm:$0xff]
        %v251 = vld [vmem:[%s239 + $0x58] sm:$0xff]
        %v252 = vld [vmem:[%s239 + $0x60] sm:$0xff]
        %v253 = vld [vmem:[%s239 + $0x68] sm:$0xff]
        %v254 = vld [vmem:[%s239 + $0x70] sm:$0x3]
        %v255 = vld [vmem:[%s239 + $0x78] sm:$0xff]
        %v256 = vld [vmem:[%s239 + $0x80] sm:$0xff]
        %v257 = vld [vmem:[%s239 + $0x88] sm:$0xff]
        %v258 = vld [vmem:[%s239 + $0x90] sm:$0xff]
        %v259 = vld [vmem:[%s239 + $0x98] sm:$0x3]
        %v260 = vld [vmem:[%s239 + $0xa0] sm:$0xff]
        %v261 = vld [vmem:[%s239 + $0xa8] sm:$0xff]
        %v262 = vld [vmem:[%s239 + $0xb0] sm:$0xff]
        %v263 = vld [vmem:[%s239 + $0xb8] sm:$0xff]
        %v264 = vld [vmem:[%s239 + $0xc0] sm:$0x3]
        %v265 = vld [vmem:[%s239 + $0xc8] sm:$0xff]
        %v266 = vld [vmem:[%s239 + $0xd0] sm:$0xff]
        %v267 = vld [vmem:[%s239 + $0xd8] sm:$0xff]
        %v268 = vld [vmem:[%s239 + $0xe0] sm:$0xff]
        %v269 = vld [vmem:[%s239 + $0xe8] sm:$0x3]
        %v270 = vld [vmem:[%s239 + $0xf0] sm:$0xff]
        %v271 = vld [vmem:[%s239 + $0xf8] sm:$0xff]
        %v272 = vld [vmem:[%s239 + $0x100] sm:$0xff]
        %v273 = vld [vmem:[%s239 + $0x108] sm:$0xff]
        %v274 = vld [vmem:[%s239 + $0x110] sm:$0x3]
        %v275 = vld [vmem:[%s239 + $0x118] sm:$0xff]
        %v276 = vld [vmem:[%s239 + $0x120] sm:$0xff]
        %v277 = vld [vmem:[%s239 + $0x128] sm:$0xff]
        %v278 = vld [vmem:[%s239 + $0x130] sm:$0xff]
        %v279 = vld [vmem:[%s239 + $0x138] sm:$0x3]
        %v280 = vld [vmem:[%s239 + $0x140] sm:$0xff]
        %v281 = vld [vmem:[%s239 + $0x148] sm:$0xff]
        %v282 = vld [vmem:[%s239 + $0x150] sm:$0xff]
        %v283 = vld [vmem:[%s239 + $0x158] sm:$0xff]
        %v284 = vld [vmem:[%s239 + $0x160] sm:$0x3]
        %v285 = vld [vmem:[%s239 + $0x168] sm:$0xff]
        %v286 = vld [vmem:[%s239 + $0x170] sm:$0xff]
        %v287 = vld [vmem:[%s239 + $0x178] sm:$0xff]
        %v288 = vld [vmem:[%s239 + $0x180] sm:$0xff]
        %v289 = vld [vmem:[%s239 + $0x188] sm:$0x3]
        %vm330 = vcmask 1046528
        %v331 = vrot.slane %v240, 1
        %v332 = vrot.slane %v241, 1
        %v333 = vsel %vm330, %v331, %v332
        %v334 = vrot.slane %v242, 1
        %v335 = vsel %vm330, %v332, %v334
        %v336 = vrot.slane %v243, 1
        %v337 = vsel %vm330, %v334, %v336
        %v338 = vrot.slane %v244, 1
        %v339 = vsel %vm330, %v336, %v338
        %v340 = vrot.slane %v245, 1
        %v341 = vrot.slane %v246, 1
        %v342 = vsel %vm330, %v340, %v341
        %v343 = vrot.slane %v247, 1
        %v344 = vsel %vm330, %v341, %v343
        %v345 = vrot.slane %v248, 1
        %v346 = vsel %vm330, %v343, %v345
        %v347 = vrot.slane %v249, 1
        %v348 = vsel %vm330, %v345, %v347
        %v349 = vrot.slane %v250, 1
        %v350 = vrot.slane %v251, 1
        %v351 = vsel %vm330, %v349, %v350
        %v352 = vrot.slane %v252, 1
        %v353 = vsel %vm330, %v350, %v352
        %v354 = vrot.slane %v253, 1
        %v355 = vsel %vm330, %v352, %v354
        %v356 = vrot.slane %v254, 1
        %v357 = vsel %vm330, %v354, %v356
        %v358 = vrot.slane %v255, 1
        %v359 = vrot.slane %v256, 1
        %v360 = vsel %vm330, %v358, %v359
        %v361 = vrot.slane %v257, 1
        %v362 = vsel %vm330, %v359, %v361
        %v363 = vrot.slane %v258, 1
        %v364 = vsel %vm330, %v361, %v363
        %v365 = vrot.slane %v259, 1
        %v366 = vsel %vm330, %v363, %v365
        %v367 = vrot.slane %v260, 1
        %v368 = vrot.slane %v261, 1
        %v369 = vsel %vm330, %v367, %v368
        %v370 = vrot.slane %v262, 1
        %v371 = vsel %vm330, %v368, %v370
        %v372 = vrot.slane %v263, 1
        %v373 = vsel %vm330, %v370, %v372
        %v374 = vrot.slane %v264, 1
        %v375 = vsel %vm330, %v372, %v374
        %v376 = vrot.slane %v265, 1
        %v377 = vrot.slane %v266, 1
        %v378 = vsel %vm330, %v376, %v377
        %v379 = vrot.slane %v267, 1
        %v380 = vsel %vm330, %v377, %v379
        %v381 = vrot.slane %v268, 1
        %v382 = vsel %vm330, %v379, %v381
        %v383 = vrot.slane %v269, 1
        %v384 = vsel %vm330, %v381, %v383
        %v385 = vrot.slane %v270, 1
        %v386 = vrot.slane %v271, 1
        %v387 = vsel %vm330, %v385, %v386
        %v388 = vrot.slane %v272, 1
        %v389 = vsel %vm330, %v386, %v388
        %v390 = vrot.slane %v273, 1
        %v391 = vsel %vm330, %v388, %v390
        %v392 = vrot.slane %v274, 1
        %v393 = vsel %vm330, %v390, %v392
        %v394 = vrot.slane %v275, 1
        %v395 = vrot.slane %v276, 1
        %v396 = vsel %vm330, %v394, %v395
        %v397 = vrot.slane %v277, 1
        %v398 = vsel %vm330, %v395, %v397
        %v399 = vrot.slane %v278, 1
        %v400 = vsel %vm330, %v397, %v399
        %v401 = vrot.slane %v279, 1
        %v402 = vsel %vm330, %v399, %v401
        %403 = vrot.lane.b32.xlu0 %v333, 16
        %v404 = vpop.permute.xlu0 %403
        %405 = vrot.lane.b32.xlu0 %v335, 16
        %v406 = vpop.permute.xlu0 %405
        %407 = vrot.lane.b32.xlu0 %v337, 16
        %v408 = vpop.permute.xlu0 %407
        %409 = vrot.lane.b32.xlu0 %v339, 16
        %v410 = vpop.permute.xlu0 %409
        %411 = vrot.lane.b32.xlu0 %v342, 16
        %v412 = vpop.permute.xlu0 %411
        %413 = vrot.lane.b32.xlu0 %v344, 16
        %v414 = vpop.permute.xlu0 %413
        %415 = vrot.lane.b32.xlu0 %v346, 16
        %v416 = vpop.permute.xlu0 %415
        %417 = vrot.lane.b32.xlu0 %v348, 16
        %v418 = vpop.permute.xlu0 %417
        %419 = vrot.lane.b32.xlu0 %v351, 16
        %v420 = vpop.permute.xlu0 %419
        %421 = vrot.lane.b32.xlu0 %v353, 16
        %v422 = vpop.permute.xlu0 %421
        %423 = vrot.lane.b32.xlu0 %v355, 16
        %v424 = vpop.permute.xlu0 %423
        %425 = vrot.lane.b32.xlu0 %v357, 16
        %v426 = vpop.permute.xlu0 %425
        %427 = vrot.lane.b32.xlu0 %v360, 16
        %v428 = vpop.permute.xlu0 %427
        %429 = vrot.lane.b32.xlu0 %v362, 16
        %v430 = vpop.permute.xlu0 %429
        %431 = vrot.lane.b32.xlu0 %v364, 16
        %v432 = vpop.permute.xlu0 %431
        %433 = vrot.lane.b32.xlu0 %v366, 16
        %v434 = vpop.permute.xlu0 %433
        %435 = vrot.lane.b32.xlu0 %v369, 16
        %v436 = vpop.permute.xlu0 %435
        %437 = vrot.lane.b32.xlu0 %v371, 16
        %v438 = vpop.permute.xlu0 %437
        %439 = vrot.lane.b32.xlu0 %v373, 16
        %v440 = vpop.permute.xlu0 %439
        %441 = vrot.lane.b32.xlu0 %v375, 16
        %v442 = vpop.permute.xlu0 %441
        %443 = vrot.lane.b32.xlu0 %v378, 16
        %v444 = vpop.permute.xlu0 %443
        %445 = vrot.lane.b32.xlu0 %v380, 16
        %v446 = vpop.permute.xlu0 %445
        %447 = vrot.lane.b32.xlu0 %v382, 16
        %v448 = vpop.permute.xlu0 %447
        %449 = vrot.lane.b32.xlu0 %v384, 16
        %v450 = vpop.permute.xlu0 %449
        %451 = vrot.lane.b32.xlu0 %v387, 16
        %v452 = vpop.permute.xlu0 %451
        %453 = vrot.lane.b32.xlu0 %v389, 16
        %v454 = vpop.permute.xlu0 %453
        %455 = vrot.lane.b32.xlu0 %v391, 16
        %v456 = vpop.permute.xlu0 %455
        %457 = vrot.lane.b32.xlu0 %v393, 16
        %v458 = vpop.permute.xlu0 %457
        %459 = vrot.lane.b32.xlu0 %v396, 16
        %v460 = vpop.permute.xlu0 %459
        %461 = vrot.lane.b32.xlu0 %v398, 16
        %v462 = vpop.permute.xlu0 %461
        %463 = vrot.lane.b32.xlu0 %v400, 16
        %v464 = vpop.permute.xlu0 %463
        %465 = vrot.lane.b32.xlu0 %v402, 16
        %v466 = vpop.permute.xlu0 %465
        %vm499 = vcmask 1045504
        %v500 = vrot.slane %v240, 2
        %v501 = vrot.slane %v241, 2
        %v502 = vsel %vm499, %v500, %v501
        %v503 = vrot.slane %v242, 2
        %v504 = vsel %vm499, %v501, %v503
        %v505 = vrot.slane %v243, 2
        %v506 = vsel %vm499, %v503, %v505
        %v507 = vrot.slane %v244, 2
        %v508 = vsel %vm499, %v505, %v507
        %v509 = vrot.slane %v245, 2
        %v510 = vrot.slane %v246, 2
        %v511 = vsel %vm499, %v509, %v510
        %v512 = vrot.slane %v247, 2
        %v513 = vsel %vm499, %v510, %v512
        %v514 = vrot.slane %v248, 2
        %v515 = vsel %vm499, %v512, %v514
        %v516 = vrot.slane %v249, 2
        %v517 = vsel %vm499, %v514, %v516
        %v518 = vrot.slane %v250, 2
        %v519 = vrot.slane %v251, 2
        %v520 = vsel %vm499, %v518, %v519
        %v521 = vrot.slane %v252, 2
        %v522 = vsel %vm499, %v519, %v521
        %v523 = vrot.slane %v253, 2
        %v524 = vsel %vm499, %v521, %v523
        %v525 = vrot.slane %v254, 2
        %v526 = vsel %vm499, %v523, %v525
        %v527 = vrot.slane %v255, 2
        %v528 = vrot.slane %v256, 2
        %v529 = vsel %vm499, %v527, %v528
        %v530 = vrot.slane %v257, 2
        %v531 = vsel %vm499, %v528, %v530
        %v532 = vrot.slane %v258, 2
        %v533 = vsel %vm499, %v530, %v532
        %v534 = vrot.slane %v259, 2
        %v535 = vsel %vm499, %v532, %v534
        %v536 = vrot.slane %v260, 2
        %v537 = vrot.slane %v261, 2
        %v538 = vsel %vm499, %v536, %v537
        %v539 = vrot.slane %v262, 2
        %v540 = vsel %vm499, %v537, %v539
        %v541 = vrot.slane %v263, 2
        %v542 = vsel %vm499, %v539, %v541
        %v543 = vrot.slane %v264, 2
        %v544 = vsel %vm499, %v541, %v543
        %v545 = vrot.slane %v265, 2
        %v546 = vrot.slane %v266, 2
        %v547 = vsel %vm499, %v545, %v546
        %v548 = vrot.slane %v267, 2
        %v549 = vsel %vm499, %v546, %v548
        %v550 = vrot.slane %v268, 2
        %v551 = vsel %vm499, %v548, %v550
        %v552 = vrot.slane %v269, 2
        %v553 = vsel %vm499, %v550, %v552
        %v554 = vrot.slane %v270, 2
        %v555 = vrot.slane %v271, 2
        %v556 = vsel %vm499, %v554, %v555
        %v557 = vrot.slane %v272, 2
        %v558 = vsel %vm499, %v555, %v557
        %v559 = vrot.slane %v273, 2
        %v560 = vsel %vm499, %v557, %v559
        %v561 = vrot.slane %v274, 2
        %v562 = vsel %vm499, %v559, %v561
        %v563 = vrot.slane %v275, 2
        %v564 = vrot.slane %v276, 2
        %v565 = vsel %vm499, %v563, %v564
        %v566 = vrot.slane %v277, 2
        %v567 = vsel %vm499, %v564, %v566
        %v568 = vrot.slane %v278, 2
        %v569 = vsel %vm499, %v566, %v568
        %v570 = vrot.slane %v279, 2
        %v571 = vsel %vm499, %v568, %v570
        %572 = vrot.lane.b32.xlu0 %v502, 32
        %v573 = vpop.permute.xlu0 %572
        %574 = vrot.lane.b32.xlu0 %v504, 32
        %v575 = vpop.permute.xlu0 %574
        %576 = vrot.lane.b32.xlu0 %v506, 32
        %v577 = vpop.permute.xlu0 %576
        %578 = vrot.lane.b32.xlu0 %v508, 32
        %v579 = vpop.permute.xlu0 %578
        %580 = vrot.lane.b32.xlu0 %v511, 32
        %v581 = vpop.permute.xlu0 %580
        %582 = vrot.lane.b32.xlu0 %v513, 32
        %v583 = vpop.permute.xlu0 %582
        %584 = vrot.lane.b32.xlu0 %v515, 32
        %v585 = vpop.permute.xlu0 %584
        %586 = vrot.lane.b32.xlu0 %v517, 32
        %v587 = vpop.permute.xlu0 %586
        %588 = vrot.lane.b32.xlu0 %v520, 32
        %v589 = vpop.permute.xlu0 %588
        %590 = vrot.lane.b32.xlu0 %v522, 32
        %v591 = vpop.permute.xlu0 %590
        %592 = vrot.lane.b32.xlu0 %v524, 32
        %v593 = vpop.permute.xlu0 %592
        %594 = vrot.lane.b32.xlu0 %v526, 32
        %v595 = vpop.permute.xlu0 %594
        %596 = vrot.lane.b32.xlu0 %v529, 32
        %v597 = vpop.permute.xlu0 %596
        %598 = vrot.lane.b32.xlu0 %v531, 32
        %v599 = vpop.permute.xlu0 %598
        %600 = vrot.lane.b32.xlu0 %v533, 32
        %v601 = vpop.permute.xlu0 %600
        %602 = vrot.lane.b32.xlu0 %v535, 32
        %v603 = vpop.permute.xlu0 %602
        %604 = vrot.lane.b32.xlu0 %v538, 32
        %v605 = vpop.permute.xlu0 %604
        %606 = vrot.lane.b32.xlu0 %v540, 32
        %v607 = vpop.permute.xlu0 %606
        %608 = vrot.lane.b32.xlu0 %v542, 32
        %v609 = vpop.permute.xlu0 %608
        %610 = vrot.lane.b32.xlu0 %v544, 32
        %v611 = vpop.permute.xlu0 %610
        %612 = vrot.lane.b32.xlu0 %v547, 32
        %v613 = vpop.permute.xlu0 %612
        %614 = vrot.lane.b32.xlu0 %v549, 32
        %v615 = vpop.permute.xlu0 %614
        %616 = vrot.lane.b32.xlu0 %v551, 32
        %v617 = vpop.permute.xlu0 %616
        %618 = vrot.lane.b32.xlu0 %v553, 32
        %v619 = vpop.permute.xlu0 %618
        %620 = vrot.lane.b32.xlu0 %v556, 32
        %v621 = vpop.permute.xlu0 %620
        %622 = vrot.lane.b32.xlu0 %v558, 32
        %v623 = vpop.permute.xlu0 %622
        %624 = vrot.lane.b32.xlu0 %v560, 32
        %v625 = vpop.permute.xlu0 %624
        %626 = vrot.lane.b32.xlu0 %v562, 32
        %v627 = vpop.permute.xlu0 %626
        %628 = vrot.lane.b32.xlu0 %v565, 32
        %v629 = vpop.permute.xlu0 %628
        %630 = vrot.lane.b32.xlu0 %v567, 32
        %v631 = vpop.permute.xlu0 %630
        %632 = vrot.lane.b32.xlu0 %v569, 32
        %v633 = vpop.permute.xlu0 %632
        %634 = vrot.lane.b32.xlu0 %v571, 32
        %v635 = vpop.permute.xlu0 %634
        %672 = vrot.lane.b32.xlu0 %v245, 48
        %v673 = vpop.permute.xlu0 %672
        %674 = vrot.lane.b32.xlu0 %v246, 48
        %v675 = vpop.permute.xlu0 %674
        %676 = vrot.lane.b32.xlu0 %v247, 48
        %v677 = vpop.permute.xlu0 %676
        %678 = vrot.lane.b32.xlu0 %v248, 48
        %v679 = vpop.permute.xlu0 %678
        %680 = vrot.lane.b32.xlu0 %v250, 48
        %v681 = vpop.permute.xlu0 %680
        %682 = vrot.lane.b32.xlu0 %v251, 48
        %v683 = vpop.permute.xlu0 %682
        %684 = vrot.lane.b32.xlu0 %v252, 48
        %v685 = vpop.permute.xlu0 %684
        %686 = vrot.lane.b32.xlu0 %v253, 48
        %v687 = vpop.permute.xlu0 %686
        %688 = vrot.lane.b32.xlu0 %v255, 48
        %v689 = vpop.permute.xlu0 %688
        %690 = vrot.lane.b32.xlu0 %v256, 48
        %v691 = vpop.permute.xlu0 %690
        %692 = vrot.lane.b32.xlu0 %v257, 48
        %v693 = vpop.permute.xlu0 %692
        %694 = vrot.lane.b32.xlu0 %v258, 48
        %v695 = vpop.permute.xlu0 %694
        %696 = vrot.lane.b32.xlu0 %v260, 48
        %v697 = vpop.permute.xlu0 %696
        %698 = vrot.lane.b32.xlu0 %v261, 48
        %v699 = vpop.permute.xlu0 %698
        %700 = vrot.lane.b32.xlu0 %v262, 48
        %v701 = vpop.permute.xlu0 %700
        %702 = vrot.lane.b32.xlu0 %v263, 48
        %v703 = vpop.permute.xlu0 %702
        %704 = vrot.lane.b32.xlu0 %v265, 48
        %v705 = vpop.permute.xlu0 %704
        %706 = vrot.lane.b32.xlu0 %v266, 48
        %v707 = vpop.permute.xlu0 %706
        %708 = vrot.lane.b32.xlu0 %v267, 48
        %v709 = vpop.permute.xlu0 %708
        %710 = vrot.lane.b32.xlu0 %v268, 48
        %v711 = vpop.permute.xlu0 %710
        %712 = vrot.lane.b32.xlu0 %v270, 48
        %v713 = vpop.permute.xlu0 %712
        %714 = vrot.lane.b32.xlu0 %v271, 48
        %v715 = vpop.permute.xlu0 %714
        %716 = vrot.lane.b32.xlu0 %v272, 48
        %v717 = vpop.permute.xlu0 %716
        %718 = vrot.lane.b32.xlu0 %v273, 48
        %v719 = vpop.permute.xlu0 %718
        %720 = vrot.lane.b32.xlu0 %v275, 48
        %v721 = vpop.permute.xlu0 %720
        %722 = vrot.lane.b32.xlu0 %v276, 48
        %v723 = vpop.permute.xlu0 %722
        %724 = vrot.lane.b32.xlu0 %v277, 48
        %v725 = vpop.permute.xlu0 %724
        %726 = vrot.lane.b32.xlu0 %v278, 48
        %v727 = vpop.permute.xlu0 %726
        %728 = vrot.lane.b32.xlu0 %v280, 48
        %v729 = vpop.permute.xlu0 %728
        %730 = vrot.lane.b32.xlu0 %v281, 48
        %v731 = vpop.permute.xlu0 %730
        %732 = vrot.lane.b32.xlu0 %v282, 48
        %v733 = vpop.permute.xlu0 %732
        %734 = vrot.lane.b32.xlu0 %v283, 48
        %v735 = vpop.permute.xlu0 %734
        %v769 = vrot.slane %v280, 1
        %v770 = vrot.slane %v281, 1
        %v771 = vsel %vm330, %v769, %v770
        %v772 = vrot.slane %v282, 1
        %v773 = vsel %vm330, %v770, %v772
        %v774 = vrot.slane %v283, 1
        %v775 = vsel %vm330, %v772, %v774
        %v776 = vrot.slane %v284, 1
        %v777 = vsel %vm330, %v774, %v776
        %778 = vrot.lane.b32.xlu0 %v342, 64
        %v779 = vpop.permute.xlu0 %778
        %780 = vrot.lane.b32.xlu0 %v344, 64
        %v781 = vpop.permute.xlu0 %780
        %782 = vrot.lane.b32.xlu0 %v346, 64
        %v783 = vpop.permute.xlu0 %782
        %784 = vrot.lane.b32.xlu0 %v348, 64
        %v785 = vpop.permute.xlu0 %784
        %786 = vrot.lane.b32.xlu0 %v351, 64
        %v787 = vpop.permute.xlu0 %786
        %788 = vrot.lane.b32.xlu0 %v353, 64
        %v789 = vpop.permute.xlu0 %788
        %790 = vrot.lane.b32.xlu0 %v355, 64
        %v791 = vpop.permute.xlu0 %790
        %792 = vrot.lane.b32.xlu0 %v357, 64
        %v793 = vpop.permute.xlu0 %792
        %794 = vrot.lane.b32.xlu0 %v360, 64
        %v795 = vpop.permute.xlu0 %794
        %796 = vrot.lane.b32.xlu0 %v362, 64
        %v797 = vpop.permute.xlu0 %796
        %798 = vrot.lane.b32.xlu0 %v364, 64
        %v799 = vpop.permute.xlu0 %798
        %800 = vrot.lane.b32.xlu0 %v366, 64
        %v801 = vpop.permute.xlu0 %800
        %802 = vrot.lane.b32.xlu0 %v369, 64
        %v803 = vpop.permute.xlu0 %802
        %804 = vrot.lane.b32.xlu0 %v371, 64
        %v805 = vpop.permute.xlu0 %804
        %806 = vrot.lane.b32.xlu0 %v373, 64
        %v807 = vpop.permute.xlu0 %806
        %808 = vrot.lane.b32.xlu0 %v375, 64
        %v809 = vpop.permute.xlu0 %808
        %810 = vrot.lane.b32.xlu0 %v378, 64
        %v811 = vpop.permute.xlu0 %810
        %812 = vrot.lane.b32.xlu0 %v380, 64
        %v813 = vpop.permute.xlu0 %812
        %814 = vrot.lane.b32.xlu0 %v382, 64
        %v815 = vpop.permute.xlu0 %814
        %816 = vrot.lane.b32.xlu0 %v384, 64
        %v817 = vpop.permute.xlu0 %816
        %818 = vrot.lane.b32.xlu0 %v387, 64
        %v819 = vpop.permute.xlu0 %818
        %820 = vrot.lane.b32.xlu0 %v389, 64
        %v821 = vpop.permute.xlu0 %820
        %822 = vrot.lane.b32.xlu0 %v391, 64
        %v823 = vpop.permute.xlu0 %822
        %824 = vrot.lane.b32.xlu0 %v393, 64
        %v825 = vpop.permute.xlu0 %824
        %826 = vrot.lane.b32.xlu0 %v396, 64
        %v827 = vpop.permute.xlu0 %826
        %828 = vrot.lane.b32.xlu0 %v398, 64
        %v829 = vpop.permute.xlu0 %828
        %830 = vrot.lane.b32.xlu0 %v400, 64
        %v831 = vpop.permute.xlu0 %830
        %832 = vrot.lane.b32.xlu0 %v402, 64
        %v833 = vpop.permute.xlu0 %832
        %834 = vrot.lane.b32.xlu0 %v771, 64
        %v835 = vpop.permute.xlu0 %834
        %836 = vrot.lane.b32.xlu0 %v773, 64
        %v837 = vpop.permute.xlu0 %836
        %838 = vrot.lane.b32.xlu0 %v775, 64
        %v839 = vpop.permute.xlu0 %838
        %840 = vrot.lane.b32.xlu0 %v777, 64
        %v841 = vpop.permute.xlu0 %840
        %v874 = vrot.slane %v280, 2
        %v875 = vrot.slane %v281, 2
        %v876 = vsel %vm499, %v874, %v875
        %v877 = vrot.slane %v282, 2
        %v878 = vsel %vm499, %v875, %v877
        %v879 = vrot.slane %v283, 2
        %v880 = vsel %vm499, %v877, %v879
        %v881 = vrot.slane %v284, 2
        %v882 = vsel %vm499, %v879, %v881
        %883 = vrot.lane.b32.xlu0 %v511, 80
        %v884 = vpop.permute.xlu0 %883
        %885 = vrot.lane.b32.xlu0 %v513, 80
        %v886 = vpop.permute.xlu0 %885
        %887 = vrot.lane.b32.xlu0 %v515, 80
        %v888 = vpop.permute.xlu0 %887
        %889 = vrot.lane.b32.xlu0 %v517, 80
        %v890 = vpop.permute.xlu0 %889
        %891 = vrot.lane.b32.xlu0 %v520, 80
        %v892 = vpop.permute.xlu0 %891
        %893 = vrot.lane.b32.xlu0 %v522, 80
        %v894 = vpop.permute.xlu0 %893
        %895 = vrot.lane.b32.xlu0 %v524, 80
        %v896 = vpop.permute.xlu0 %895
        %897 = vrot.lane.b32.xlu0 %v526, 80
        %v898 = vpop.permute.xlu0 %897
        %899 = vrot.lane.b32.xlu0 %v529, 80
        %v900 = vpop.permute.xlu0 %899
        %901 = vrot.lane.b32.xlu0 %v531, 80
        %v902 = vpop.permute.xlu0 %901
        %903 = vrot.lane.b32.xlu0 %v533, 80
        %v904 = vpop.permute.xlu0 %903
        %905 = vrot.lane.b32.xlu0 %v535, 80
        %v906 = vpop.permute.xlu0 %905
        %907 = vrot.lane.b32.xlu0 %v538, 80
        %v908 = vpop.permute.xlu0 %907
        %909 = vrot.lane.b32.xlu0 %v540, 80
        %v910 = vpop.permute.xlu0 %909
        %911 = vrot.lane.b32.xlu0 %v542, 80
        %v912 = vpop.permute.xlu0 %911
        %913 = vrot.lane.b32.xlu0 %v544, 80
        %v914 = vpop.permute.xlu0 %913
        %915 = vrot.lane.b32.xlu0 %v547, 80
        %v916 = vpop.permute.xlu0 %915
        %917 = vrot.lane.b32.xlu0 %v549, 80
        %v918 = vpop.permute.xlu0 %917
        %919 = vrot.lane.b32.xlu0 %v551, 80
        %v920 = vpop.permute.xlu0 %919
        %921 = vrot.lane.b32.xlu0 %v553, 80
        %v922 = vpop.permute.xlu0 %921
        %923 = vrot.lane.b32.xlu0 %v556, 80
        %v924 = vpop.permute.xlu0 %923
        %925 = vrot.lane.b32.xlu0 %v558, 80
        %v926 = vpop.permute.xlu0 %925
        %927 = vrot.lane.b32.xlu0 %v560, 80
        %v928 = vpop.permute.xlu0 %927
        %929 = vrot.lane.b32.xlu0 %v562, 80
        %v930 = vpop.permute.xlu0 %929
        %931 = vrot.lane.b32.xlu0 %v565, 80
        %v932 = vpop.permute.xlu0 %931
        %933 = vrot.lane.b32.xlu0 %v567, 80
        %v934 = vpop.permute.xlu0 %933
        %935 = vrot.lane.b32.xlu0 %v569, 80
        %v936 = vpop.permute.xlu0 %935
        %937 = vrot.lane.b32.xlu0 %v571, 80
        %v938 = vpop.permute.xlu0 %937
        %939 = vrot.lane.b32.xlu0 %v876, 80
        %v940 = vpop.permute.xlu0 %939
        %941 = vrot.lane.b32.xlu0 %v878, 80
        %v942 = vpop.permute.xlu0 %941
        %943 = vrot.lane.b32.xlu0 %v880, 80
        %v944 = vpop.permute.xlu0 %943
        %945 = vrot.lane.b32.xlu0 %v882, 80
        %v946 = vpop.permute.xlu0 %945
        %983 = vrot.lane.b32.xlu0 %v250, 96
        %v984 = vpop.permute.xlu0 %983
        %985 = vrot.lane.b32.xlu0 %v251, 96
        %v986 = vpop.permute.xlu0 %985
        %987 = vrot.lane.b32.xlu0 %v252, 96
        %v988 = vpop.permute.xlu0 %987
        %989 = vrot.lane.b32.xlu0 %v253, 96
        %v990 = vpop.permute.xlu0 %989
        %991 = vrot.lane.b32.xlu0 %v255, 96
        %v992 = vpop.permute.xlu0 %991
        %993 = vrot.lane.b32.xlu0 %v256, 96
        %v994 = vpop.permute.xlu0 %993
        %995 = vrot.lane.b32.xlu0 %v257, 96
        %v996 = vpop.permute.xlu0 %995
        %997 = vrot.lane.b32.xlu0 %v258, 96
        %v998 = vpop.permute.xlu0 %997
        %999 = vrot.lane.b32.xlu0 %v260, 96
        %v1000 = vpop.permute.xlu0 %999
        %1001 = vrot.lane.b32.xlu0 %v261, 96
        %v1002 = vpop.permute.xlu0 %1001
        %1003 = vrot.lane.b32.xlu0 %v262, 96
        %v1004 = vpop.permute.xlu0 %1003
        %1005 = vrot.lane.b32.xlu0 %v263, 96
        %v1006 = vpop.permute.xlu0 %1005
        %1007 = vrot.lane.b32.xlu0 %v265, 96
        %v1008 = vpop.permute.xlu0 %1007
        %1009 = vrot.lane.b32.xlu0 %v266, 96
        %v1010 = vpop.permute.xlu0 %1009
        %1011 = vrot.lane.b32.xlu0 %v267, 96
        %v1012 = vpop.permute.xlu0 %1011
        %1013 = vrot.lane.b32.xlu0 %v268, 96
        %v1014 = vpop.permute.xlu0 %1013
        %1015 = vrot.lane.b32.xlu0 %v270, 96
        %v1016 = vpop.permute.xlu0 %1015
        %1017 = vrot.lane.b32.xlu0 %v271, 96
        %v1018 = vpop.permute.xlu0 %1017
        %1019 = vrot.lane.b32.xlu0 %v272, 96
        %v1020 = vpop.permute.xlu0 %1019
        %1021 = vrot.lane.b32.xlu0 %v273, 96
        %v1022 = vpop.permute.xlu0 %1021
        %1023 = vrot.lane.b32.xlu0 %v275, 96
        %v1024 = vpop.permute.xlu0 %1023
        %1025 = vrot.lane.b32.xlu0 %v276, 96
        %v1026 = vpop.permute.xlu0 %1025
        %1027 = vrot.lane.b32.xlu0 %v277, 96
        %v1028 = vpop.permute.xlu0 %1027
        %1029 = vrot.lane.b32.xlu0 %v278, 96
        %v1030 = vpop.permute.xlu0 %1029
        %1031 = vrot.lane.b32.xlu0 %v280, 96
        %v1032 = vpop.permute.xlu0 %1031
        %1033 = vrot.lane.b32.xlu0 %v281, 96
        %v1034 = vpop.permute.xlu0 %1033
        %1035 = vrot.lane.b32.xlu0 %v282, 96
        %v1036 = vpop.permute.xlu0 %1035
        %1037 = vrot.lane.b32.xlu0 %v283, 96
        %v1038 = vpop.permute.xlu0 %1037
        %1039 = vrot.lane.b32.xlu0 %v285, 96
        %v1040 = vpop.permute.xlu0 %1039
        %1041 = vrot.lane.b32.xlu0 %v286, 96
        %v1042 = vpop.permute.xlu0 %1041
        %1043 = vrot.lane.b32.xlu0 %v287, 96
        %v1044 = vpop.permute.xlu0 %1043
        %1045 = vrot.lane.b32.xlu0 %v288, 96
        %v1046 = vpop.permute.xlu0 %1045
        %v1080 = vrot.slane %v285, 1
        %v1081 = vrot.slane %v286, 1
        %v1082 = vsel %vm330, %v1080, %v1081
        %v1083 = vrot.slane %v287, 1
        %v1084 = vsel %vm330, %v1081, %v1083
        %v1085 = vrot.slane %v288, 1
        %v1086 = vsel %vm330, %v1083, %v1085
        %v1087 = vrot.slane %v289, 1
        %v1088 = vsel %vm330, %v1085, %v1087
        %1089 = vrot.lane.b32.xlu0 %v351, 112
        %v1090 = vpop.permute.xlu0 %1089
        %1091 = vrot.lane.b32.xlu0 %v353, 112
        %v1092 = vpop.permute.xlu0 %1091
        %1093 = vrot.lane.b32.xlu0 %v355, 112
        %v1094 = vpop.permute.xlu0 %1093
        %1095 = vrot.lane.b32.xlu0 %v357, 112
        %v1096 = vpop.permute.xlu0 %1095
        %1097 = vrot.lane.b32.xlu0 %v360, 112
        %v1098 = vpop.permute.xlu0 %1097
        %1099 = vrot.lane.b32.xlu0 %v362, 112
        %v1100 = vpop.permute.xlu0 %1099
        %1101 = vrot.lane.b32.xlu0 %v364, 112
        %v1102 = vpop.permute.xlu0 %1101
        %1103 = vrot.lane.b32.xlu0 %v366, 112
        %v1104 = vpop.permute.xlu0 %1103
        %1105 = vrot.lane.b32.xlu0 %v369, 112
        %v1106 = vpop.permute.xlu0 %1105
        %1107 = vrot.lane.b32.xlu0 %v371, 112
        %v1108 = vpop.permute.xlu0 %1107
        %1109 = vrot.lane.b32.xlu0 %v373, 112
        %v1110 = vpop.permute.xlu0 %1109
        %1111 = vrot.lane.b32.xlu0 %v375, 112
        %v1112 = vpop.permute.xlu0 %1111
        %1113 = vrot.lane.b32.xlu0 %v378, 112
        %v1114 = vpop.permute.xlu0 %1113
        %1115 = vrot.lane.b32.xlu0 %v380, 112
        %v1116 = vpop.permute.xlu0 %1115
        %1117 = vrot.lane.b32.xlu0 %v382, 112
        %v1118 = vpop.permute.xlu0 %1117
        %1119 = vrot.lane.b32.xlu0 %v384, 112
        %v1120 = vpop.permute.xlu0 %1119
        %1121 = vrot.lane.b32.xlu0 %v387, 112
        %v1122 = vpop.permute.xlu0 %1121
        %1123 = vrot.lane.b32.xlu0 %v389, 112
        %v1124 = vpop.permute.xlu0 %1123
        %1125 = vrot.lane.b32.xlu0 %v391, 112
        %v1126 = vpop.permute.xlu0 %1125
        %1127 = vrot.lane.b32.xlu0 %v393, 112
        %v1128 = vpop.permute.xlu0 %1127
        %1129 = vrot.lane.b32.xlu0 %v396, 112
        %v1130 = vpop.permute.xlu0 %1129
        %1131 = vrot.lane.b32.xlu0 %v398, 112
        %v1132 = vpop.permute.xlu0 %1131
        %1133 = vrot.lane.b32.xlu0 %v400, 112
        %v1134 = vpop.permute.xlu0 %1133
        %1135 = vrot.lane.b32.xlu0 %v402, 112
        %v1136 = vpop.permute.xlu0 %1135
        %1137 = vrot.lane.b32.xlu0 %v771, 112
        %v1138 = vpop.permute.xlu0 %1137
        %1139 = vrot.lane.b32.xlu0 %v773, 112
        %v1140 = vpop.permute.xlu0 %1139
        %1141 = vrot.lane.b32.xlu0 %v775, 112
        %v1142 = vpop.permute.xlu0 %1141
        %1143 = vrot.lane.b32.xlu0 %v777, 112
        %v1144 = vpop.permute.xlu0 %1143
        %1145 = vrot.lane.b32.xlu0 %v1082, 112
        %v1146 = vpop.permute.xlu0 %1145
        %1147 = vrot.lane.b32.xlu0 %v1084, 112
        %v1148 = vpop.permute.xlu0 %1147
        %1149 = vrot.lane.b32.xlu0 %v1086, 112
        %v1150 = vpop.permute.xlu0 %1149
        %1151 = vrot.lane.b32.xlu0 %v1088, 112
        %v1152 = vpop.permute.xlu0 %1151
        %v1185 = vrot.slane %v285, 2
        %v1186 = vrot.slane %v286, 2
        %v1187 = vsel %vm499, %v1185, %v1186
        %v1188 = vrot.slane %v287, 2
        %v1189 = vsel %vm499, %v1186, %v1188
        %v1190 = vrot.slane %v288, 2
        %v1191 = vsel %vm499, %v1188, %v1190
        %v1192 = vrot.slane %v289, 2
        %v1193 = vsel %vm499, %v1190, %v1192
        %vm1194 = vcmask 130048
        %v1195 = vsel %vm1194, %v240, %v404
        %v1196 = vsel %vm1194, %v241, %v406
        %v1197 = vsel %vm1194, %v242, %v408
        %v1198 = vsel %vm1194, %v243, %v410
        %v1199 = vsel %vm1194, %v245, %v412
        %v1200 = vsel %vm1194, %v246, %v414
        %v1201 = vsel %vm1194, %v247, %v416
        %v1202 = vsel %vm1194, %v248, %v418
        %v1203 = vsel %vm1194, %v250, %v420
        %v1204 = vsel %vm1194, %v251, %v422
        %v1205 = vsel %vm1194, %v252, %v424
        %v1206 = vsel %vm1194, %v253, %v426
        %v1207 = vsel %vm1194, %v255, %v428
        %v1208 = vsel %vm1194, %v256, %v430
        %v1209 = vsel %vm1194, %v257, %v432
        %v1210 = vsel %vm1194, %v258, %v434
        %v1211 = vsel %vm1194, %v260, %v436
        %v1212 = vsel %vm1194, %v261, %v438
        %v1213 = vsel %vm1194, %v262, %v440
        %v1214 = vsel %vm1194, %v263, %v442
        %v1215 = vsel %vm1194, %v265, %v444
        %v1216 = vsel %vm1194, %v266, %v446
        %v1217 = vsel %vm1194, %v267, %v448
        %v1218 = vsel %vm1194, %v268, %v450
        %v1219 = vsel %vm1194, %v270, %v452
        %v1220 = vsel %vm1194, %v271, %v454
        %v1221 = vsel %vm1194, %v272, %v456
        %v1222 = vsel %vm1194, %v273, %v458
        %v1223 = vsel %vm1194, %v275, %v460
        %v1224 = vsel %vm1194, %v276, %v462
        %v1225 = vsel %vm1194, %v277, %v464
        %v1226 = vsel %vm1194, %v278, %v466
        %vm1227 = vcmask 261120
        %v1228 = vsel %vm1227, %v1195, %v573
        %v1229 = vsel %vm1227, %v1196, %v575
        %v1230 = vsel %vm1227, %v1197, %v577
        %v1231 = vsel %vm1227, %v1198, %v579
        %v1232 = vsel %vm1227, %v1199, %v581
        %v1233 = vsel %vm1227, %v1200, %v583
        %v1234 = vsel %vm1227, %v1201, %v585
        %v1235 = vsel %vm1227, %v1202, %v587
        %v1236 = vsel %vm1227, %v1203, %v589
        %v1237 = vsel %vm1227, %v1204, %v591
        %v1238 = vsel %vm1227, %v1205, %v593
        %v1239 = vsel %vm1227, %v1206, %v595
        %v1240 = vsel %vm1227, %v1207, %v597
        %v1241 = vsel %vm1227, %v1208, %v599
        %v1242 = vsel %vm1227, %v1209, %v601
        %v1243 = vsel %vm1227, %v1210, %v603
        %v1244 = vsel %vm1227, %v1211, %v605
        %v1245 = vsel %vm1227, %v1212, %v607
        %v1246 = vsel %vm1227, %v1213, %v609
        %v1247 = vsel %vm1227, %v1214, %v611
        %v1248 = vsel %vm1227, %v1215, %v613
        %v1249 = vsel %vm1227, %v1216, %v615
        %v1250 = vsel %vm1227, %v1217, %v617
        %v1251 = vsel %vm1227, %v1218, %v619
        %v1252 = vsel %vm1227, %v1219, %v621
        %v1253 = vsel %vm1227, %v1220, %v623
        %v1254 = vsel %vm1227, %v1221, %v625
        %v1255 = vsel %vm1227, %v1222, %v627
        %v1256 = vsel %vm1227, %v1223, %v629
        %v1257 = vsel %vm1227, %v1224, %v631
        %v1258 = vsel %vm1227, %v1225, %v633
        %v1259 = vsel %vm1227, %v1226, %v635
        %vm1260 = vcmask 392192
        %v1261 = vsel %vm1260, %v1228, %v673
        %v1262 = vsel %vm1260, %v1229, %v675
        %v1263 = vsel %vm1260, %v1230, %v677
        %v1264 = vsel %vm1260, %v1231, %v679
        %v1265 = vsel %vm1260, %v1232, %v681
        %v1266 = vsel %vm1260, %v1233, %v683
        %v1267 = vsel %vm1260, %v1234, %v685
        %v1268 = vsel %vm1260, %v1235, %v687
        %v1269 = vsel %vm1260, %v1236, %v689
        %v1270 = vsel %vm1260, %v1237, %v691
        %v1271 = vsel %vm1260, %v1238, %v693
        %v1272 = vsel %vm1260, %v1239, %v695
        %v1273 = vsel %vm1260, %v1240, %v697
        %v1274 = vsel %vm1260, %v1241, %v699
        %v1275 = vsel %vm1260, %v1242, %v701
        %v1276 = vsel %vm1260, %v1243, %v703
        %v1277 = vsel %vm1260, %v1244, %v705
        %v1278 = vsel %vm1260, %v1245, %v707
        %v1279 = vsel %vm1260, %v1246, %v709
        %v1280 = vsel %vm1260, %v1247, %v711
        %v1281 = vsel %vm1260, %v1248, %v713
        %v1282 = vsel %vm1260, %v1249, %v715
        %v1283 = vsel %vm1260, %v1250, %v717
        %v1284 = vsel %vm1260, %v1251, %v719
        %v1285 = vsel %vm1260, %v1252, %v721
        %v1286 = vsel %vm1260, %v1253, %v723
        %v1287 = vsel %vm1260, %v1254, %v725
        %v1288 = vsel %vm1260, %v1255, %v727
        %v1289 = vsel %vm1260, %v1256, %v729
        %v1290 = vsel %vm1260, %v1257, %v731
        %v1291 = vsel %vm1260, %v1258, %v733
        %v1292 = vsel %vm1260, %v1259, %v735
        %vm1293 = vcmask 523264
        %v1294 = vsel %vm1293, %v1261, %v779
        %v1295 = vsel %vm1293, %v1262, %v781
        %v1296 = vsel %vm1293, %v1263, %v783
        %v1297 = vsel %vm1293, %v1264, %v785
        %v1298 = vsel %vm1293, %v1265, %v787
        %v1299 = vsel %vm1293, %v1266, %v789
        %v1300 = vsel %vm1293, %v1267, %v791
        %v1301 = vsel %vm1293, %v1268, %v793
        %v1302 = vsel %vm1293, %v1269, %v795
        %v1303 = vsel %vm1293, %v1270, %v797
        %v1304 = vsel %vm1293, %v1271, %v799
        %v1305 = vsel %vm1293, %v1272, %v801
        %v1306 = vsel %vm1293, %v1273, %v803
        %v1307 = vsel %vm1293, %v1274, %v805
        %v1308 = vsel %vm1293, %v1275, %v807
        %v1309 = vsel %vm1293, %v1276, %v809
        %v1310 = vsel %vm1293, %v1277, %v811
        %v1311 = vsel %vm1293, %v1278, %v813
        %v1312 = vsel %vm1293, %v1279, %v815
        %v1313 = vsel %vm1293, %v1280, %v817
        %v1314 = vsel %vm1293, %v1281, %v819
        %v1315 = vsel %vm1293, %v1282, %v821
        %v1316 = vsel %vm1293, %v1283, %v823
        %v1317 = vsel %vm1293, %v1284, %v825
        %v1318 = vsel %vm1293, %v1285, %v827
        %v1319 = vsel %vm1293, %v1286, %v829
        %v1320 = vsel %vm1293, %v1287, %v831
        %v1321 = vsel %vm1293, %v1288, %v833
        %v1322 = vsel %vm1293, %v1289, %v835
        %v1323 = vsel %vm1293, %v1290, %v837
        %v1324 = vsel %vm1293, %v1291, %v839
        %v1325 = vsel %vm1293, %v1292, %v841
        %vm1326 = vcmask 654336
        %v1327 = vsel %vm1326, %v1294, %v884
        %v1328 = vsel %vm1326, %v1295, %v886
        %v1329 = vsel %vm1326, %v1296, %v888
        %v1330 = vsel %vm1326, %v1297, %v890
        %v1331 = vsel %vm1326, %v1298, %v892
        %v1332 = vsel %vm1326, %v1299, %v894
        %v1333 = vsel %vm1326, %v1300, %v896
        %v1334 = vsel %vm1326, %v1301, %v898
        %v1335 = vsel %vm1326, %v1302, %v900
        %v1336 = vsel %vm1326, %v1303, %v902
        %v1337 = vsel %vm1326, %v1304, %v904
        %v1338 = vsel %vm1326, %v1305, %v906
        %v1339 = vsel %vm1326, %v1306, %v908
        %v1340 = vsel %vm1326, %v1307, %v910
        %v1341 = vsel %vm1326, %v1308, %v912
        %v1342 = vsel %vm1326, %v1309, %v914
        %v1343 = vsel %vm1326, %v1310, %v916
        %v1344 = vsel %vm1326, %v1311, %v918
        %v1345 = vsel %vm1326, %v1312, %v920
        %v1346 = vsel %vm1326, %v1313, %v922
        %v1347 = vsel %vm1326, %v1314, %v924
        %v1348 = vsel %vm1326, %v1315, %v926
        %v1349 = vsel %vm1326, %v1316, %v928
        %v1350 = vsel %vm1326, %v1317, %v930
        %v1351 = vsel %vm1326, %v1318, %v932
        %v1352 = vsel %vm1326, %v1319, %v934
        %v1353 = vsel %vm1326, %v1320, %v936
        %v1354 = vsel %vm1326, %v1321, %v938
        %v1355 = vsel %vm1326, %v1322, %v940
        %v1356 = vsel %vm1326, %v1323, %v942
        %v1357 = vsel %vm1326, %v1324, %v944
        %v1358 = vsel %vm1326, %v1325, %v946
        %vm1359 = vcmask 785408
        %v1360 = vsel %vm1359, %v1327, %v984
        %v1361 = vsel %vm1359, %v1328, %v986
        %v1362 = vsel %vm1359, %v1329, %v988
        %v1363 = vsel %vm1359, %v1330, %v990
        %v1364 = vsel %vm1359, %v1331, %v992
        %v1365 = vsel %vm1359, %v1332, %v994
        %v1366 = vsel %vm1359, %v1333, %v996
        %v1367 = vsel %vm1359, %v1334, %v998
        %v1368 = vsel %vm1359, %v1335, %v1000
        %v1369 = vsel %vm1359, %v1336, %v1002
        %v1370 = vsel %vm1359, %v1337, %v1004
        %v1371 = vsel %vm1359, %v1338, %v1006
        %v1372 = vsel %vm1359, %v1339, %v1008
        %v1373 = vsel %vm1359, %v1340, %v1010
        %v1374 = vsel %vm1359, %v1341, %v1012
        %v1375 = vsel %vm1359, %v1342, %v1014
        %v1376 = vsel %vm1359, %v1343, %v1016
        %v1377 = vsel %vm1359, %v1344, %v1018
        %v1378 = vsel %vm1359, %v1345, %v1020
        %v1379 = vsel %vm1359, %v1346, %v1022
        %v1380 = vsel %vm1359, %v1347, %v1024
        %v1381 = vsel %vm1359, %v1348, %v1026
        %v1382 = vsel %vm1359, %v1349, %v1028
        %v1383 = vsel %vm1359, %v1350, %v1030
        %v1384 = vsel %vm1359, %v1351, %v1032
        %v1385 = vsel %vm1359, %v1352, %v1034
        %v1386 = vsel %vm1359, %v1353, %v1036
        %v1387 = vsel %vm1359, %v1354, %v1038
        %v1388 = vsel %vm1359, %v1355, %v1040
        %v1389 = vsel %vm1359, %v1356, %v1042
        %v1390 = vsel %vm1359, %v1357, %v1044
        %v1391 = vsel %vm1359, %v1358, %v1046
        %vm1392 = vcmask 916480
        %v1393 = vsel %vm1392, %v1360, %v1090
        %v1394 = vsel %vm1392, %v1361, %v1092
        %v1395 = vsel %vm1392, %v1362, %v1094
        %v1396 = vsel %vm1392, %v1363, %v1096
        %v1397 = vsel %vm1392, %v1364, %v1098
        %v1398 = vsel %vm1392, %v1365, %v1100
        %v1399 = vsel %vm1392, %v1366, %v1102
        %v1400 = vsel %vm1392, %v1367, %v1104
        %v1401 = vsel %vm1392, %v1368, %v1106
        %v1402 = vsel %vm1392, %v1369, %v1108
        %v1403 = vsel %vm1392, %v1370, %v1110
        %v1404 = vsel %vm1392, %v1371, %v1112
        %v1405 = vsel %vm1392, %v1372, %v1114
        %v1406 = vsel %vm1392, %v1373, %v1116
        %v1407 = vsel %vm1392, %v1374, %v1118
        %v1408 = vsel %vm1392, %v1375, %v1120
        %v1409 = vsel %vm1392, %v1376, %v1122
        %v1410 = vsel %vm1392, %v1377, %v1124
        %v1411 = vsel %vm1392, %v1378, %v1126
        %v1412 = vsel %vm1392, %v1379, %v1128
        %v1413 = vsel %vm1392, %v1380, %v1130
        %v1414 = vsel %vm1392, %v1381, %v1132
        %v1415 = vsel %vm1392, %v1382, %v1134
        %v1416 = vsel %vm1392, %v1383, %v1136
        %v1417 = vsel %vm1392, %v1384, %v1138
        %v1418 = vsel %vm1392, %v1385, %v1140
        %v1419 = vsel %vm1392, %v1386, %v1142
        %v1420 = vsel %vm1392, %v1387, %v1144
        %v1421 = vsel %vm1392, %v1388, %v1146
        %v1422 = vsel %vm1392, %v1389, %v1148
        %v1423 = vsel %vm1392, %v1390, %v1150
        %v1424 = vsel %vm1392, %v1391, %v1152
        %v1425 = vld [vmem:[%s1] sm:$0xff]
        %v1426 = vld [vmem:[%s1 + $0x8] sm:$0xff]
        %v1427 = vld [vmem:[%s1 + $0x10] sm:$0xff]
        %v1428 = vld [vmem:[%s1 + $0x18] sm:$0xff]
        %v1429 = vld [vmem:[%s1 + $0x20] sm:$0xff]
        %v1430 = vld [vmem:[%s1 + $0x28] sm:$0xff]
        %v1431 = vld [vmem:[%s1 + $0x30] sm:$0xff]
        %v1432 = vld [vmem:[%s1 + $0x38] sm:$0xff]
        %v1433 = vld [vmem:[%s1 + $0x40] sm:$0xff]
        %v1434 = vld [vmem:[%s1 + $0x48] sm:$0xff]
        %v1435 = vld [vmem:[%s1 + $0x50] sm:$0xff]
        %v1436 = vld [vmem:[%s1 + $0x58] sm:$0xff]
        %v1437 = vld [vmem:[%s1 + $0x60] sm:$0xff]
        %v1438 = vld [vmem:[%s1 + $0x68] sm:$0xff]
        %v1439 = vld [vmem:[%s1 + $0x70] sm:$0xff]
        %v1440 = vld [vmem:[%s1 + $0x78] sm:$0xff]
        %v1441 = vld [vmem:[%s1 + $0x80] sm:$0xff]
        %v1442 = vld [vmem:[%s1 + $0x88] sm:$0xff]
        %v1443 = vld [vmem:[%s2] sm:$0x1]
        %v1445 = vlaneseq
        %v1446 = vshrl.u32 %v1445, 7
        %v1447 = vsub.s32 0, %v1446
        %v1448 = vrot.slane %v1443, %v1447
        %v1450 = vsel %vm1194, %v520, 0
        %v1452 = vsel %vm1194, %v522, 0
        %v1454 = vsel %vm1194, %v524, 0
        %v1456 = vsel %vm1194, %v526, 0
        %v1458 = vsel %vm1194, %v529, 0
        %v1460 = vsel %vm1194, %v531, 0
        %v1462 = vsel %vm1194, %v533, 0
        %v1464 = vsel %vm1194, %v535, 0
        %v1466 = vsel %vm1194, %v538, 0
        %v1468 = vsel %vm1194, %v540, 0
        %v1470 = vsel %vm1194, %v542, 0
        %v1472 = vsel %vm1194, %v544, 0
        %v1474 = vsel %vm1194, %v547, 0
        %v1476 = vsel %vm1194, %v549, 0
        %v1478 = vsel %vm1194, %v551, 0
        %v1480 = vsel %vm1194, %v553, 0
        %v1482 = vsel %vm1194, %v556, 0
        %v1484 = vsel %vm1194, %v558, 0
        %v1486 = vsel %vm1194, %v560, 0
        %v1488 = vsel %vm1194, %v562, 0
        %v1490 = vsel %vm1194, %v565, 0
        %v1492 = vsel %vm1194, %v567, 0
        %v1494 = vsel %vm1194, %v569, 0
        %v1496 = vsel %vm1194, %v571, 0
        %v1498 = vsel %vm1194, %v876, 0
        %v1500 = vsel %vm1194, %v878, 0
        %v1502 = vsel %vm1194, %v880, 0
        %v1504 = vsel %vm1194, %v882, 0
        %v1506 = vsel %vm1194, %v1187, 0
        %v1508 = vsel %vm1194, %v1189, 0
        %v1510 = vsel %vm1194, %v1191, 0
        %v1512 = vsel %vm1194, %v1193, 0
        %1514 = vmatprep.subr.mxu0 0.0
        %1515 = vmatpush1.msra.mxu0 %v1425
        %1516 = vmatprep.subr.mxu0 0.0
        %1517 = vmatpush1.msra.mxu0 %v1426
        %1518 = vmatprep.subr.mxu0 0.0
        %1519 = vmatpush1.msra.mxu0 %v1427
        %1520 = vmatprep.subr.mxu0 0.0
        %1521 = vmatpush1.msra.mxu0 %v1428
        %1522 = vmatprep.subr.mxu0 0.0
        %1523 = vmatpush1.msra.mxu0 %v1429
        %1524 = vmatprep.subr.mxu0 0.0
        %1525 = vmatpush1.msra.mxu0 %v1430
        %1526 = vmatprep.subr.mxu0 0.0
        %1527 = vmatpush1.msra.mxu0 %v1431
        %1528 = vmatprep.subr.mxu0 0.0
        %1529 = vmatpush1.msra.mxu0 %v1432
        %1530 = vmatprep.subr.mxu0 0.0
        %1531 = vmatpush1.msra.mxu0 %v1433
        %1532 = vmatprep.subr.mxu0 0.0
        %1533 = vmatpush1.msra.mxu0 %v1434
        %1534 = vmatprep.subr.mxu0 0.0
        %1535 = vmatpush1.msra.mxu0 %v1435
        %1536 = vmatprep.subr.mxu0 0.0
        %1537 = vmatpush1.msra.mxu0 %v1436
        %1538 = vmatprep.subr.mxu0 0.0
        %1539 = vmatpush1.msra.mxu0 %v1437
        %1540 = vmatprep.subr.mxu0 0.0
        %1541 = vmatpush1.msra.mxu0 %v1438
        %1542 = vmatprep.subr.mxu0 0.0
        %1543 = vmatpush1.msra.mxu0 %v1439
        %1544 = vmatprep.subr.mxu0 0.0
        %1545 = vmatpush1.msra.mxu0 %v1440
        %1546 = vmatprep.subr.mxu0 0.0
        %1547 = vmatpush1.msra.mxu0 %v1441
        %1548 = vmatprep.subr.mxu0 0.0
        %1549 = vmatpush1.msra.mxu0 %v1442
        %1550 = vmatprep.subr.mxu0 0.0
        %1551 = vmatpush1.msra.mxu0 0.0
        %1552 = vmatprep.subr.mxu0 0.0
        %1553 = vmatpush1.msra.mxu0 0.0
        %1554 = vmatprep.subr.mxu0 0.0
        %1555 = vmatpush1.msra.mxu0 0.0
        %1556 = vmatprep.subr.mxu0 0.0
        %1557 = vmatpush1.msra.mxu0 0.0
        %1558 = vmatprep.subr.mxu0 0.0
        %1559 = vmatpush1.msra.mxu0 0.0
        %1560 = vmatprep.subr.mxu0 0.0
        %1561 = vmatpush1.msra.mxu0 0.0
        %1562 = vmatprep.subr.mxu0 0.0
        %1563 = vmatpush1.msra.mxu0 0.0
        %1564 = vmatprep.subr.mxu0 0.0
        %1565 = vmatpush1.msra.mxu0 0.0
        %1566 = vmatprep.subr.mxu0 0.0
        %1567 = vmatpush1.msra.mxu0 0.0
        %1568 = vmatprep.subr.mxu0 0.0
        %1569 = vmatpush1.msra.mxu0 0.0
        %1570 = vmatprep.subr.mxu0 0.0
        %1571 = vmatpush1.msra.mxu0 0.0
        %1572 = vmatprep.subr.mxu0 0.0
        %1573 = vmatpush1.msra.mxu0 0.0
        %1574 = vmatprep.subr.mxu0 0.0
        %1575 = vmatpush1.msra.mxu0 0.0
        %1576 = vmatprep.subr.mxu0 0.0
        %1577 = vmatpush1.msra.mxu0 0.0
        %1578 = vmatprep.mubr.f32.mxu0 %v1450
        %1579 = vmatmul.mubr.f32.gmra.mrb[0].mxu0 %v1393
        %v1580 = vpop.f32.mrb[0].mxu0
        %v1581 = vadd.f32 %v1448, %v1580
        %v1582 = vpop.f32.mrb[0].mxu0
        %1583 = vmatprep.mubr.f32.mxu0 %v1452
        %1584 = vmatmul.mubr.f32.gmra.mrb[0].mxu0 %v1394
        %v1585 = vpop.f32.mrb[0].mxu0
        %v1586 = vadd.f32 %v1448, %v1585
        %v1587 = vpop.f32.mrb[0].mxu0
        %1588 = vmatprep.mubr.f32.mxu0 %v1454
        %1589 = vmatmul.mubr.f32.gmra.mrb[0].mxu0 %v1395
        %v1590 = vpop.f32.mrb[0].mxu0
        %v1591 = vadd.f32 %v1448, %v1590
        %v1592 = vpop.f32.mrb[0].mxu0
        %1593 = vmatprep.mubr.f32.mxu0 %v1456
        %1594 = vmatmul.mubr.f32.gmra.mrb[0].mxu0 %v1396
        %v1595 = vpop.f32.mrb[0].mxu0
        %v1596 = vadd.f32 %v1448, %v1595
        %v1597 = vpop.f32.mrb[0].mxu0
        %1598 = vmatprep.mubr.f32.mxu0 %v1458
        %1599 = vmatmul.mubr.f32.gmra.mrb[0].mxu0 %v1397
        %v1600 = vpop.f32.mrb[0].mxu0
        %v1601 = vadd.f32 %v1448, %v1600
        %v1602 = vpop.f32.mrb[0].mxu0
        %1603 = vmatprep.mubr.f32.mxu0 %v1460
        %1604 = vmatmul.mubr.f32.gmra.mrb[0].mxu0 %v1398
        %v1605 = vpop.f32.mrb[0].mxu0
        %v1606 = vadd.f32 %v1448, %v1605
        %v1607 = vpop.f32.mrb[0].mxu0
        %1608 = vmatprep.mubr.f32.mxu0 %v1462
        %1609 = vmatmul.mubr.f32.gmra.mrb[0].mxu0 %v1399
        %v1610 = vpop.f32.mrb[0].mxu0
        %v1611 = vadd.f32 %v1448, %v1610
        %v1612 = vpop.f32.mrb[0].mxu0
        %1613 = vmatprep.mubr.f32.mxu0 %v1464
        %1614 = vmatmul.mubr.f32.gmra.mrb[0].mxu0 %v1400
        %v1615 = vpop.f32.mrb[0].mxu0
        %v1616 = vadd.f32 %v1448, %v1615
        %v1617 = vpop.f32.mrb[0].mxu0
        %1618 = vmatprep.mubr.f32.mxu0 %v1466
        %1619 = vmatmul.mubr.f32.gmra.mrb[0].mxu0 %v1401
        %v1620 = vpop.f32.mrb[0].mxu0
        %v1621 = vadd.f32 %v1448, %v1620
        %v1622 = vpop.f32.mrb[0].mxu0
        %1623 = vmatprep.mubr.f32.mxu0 %v1468
        %1624 = vmatmul.mubr.f32.gmra.mrb[0].mxu0 %v1402
        %v1625 = vpop.f32.mrb[0].mxu0
        %v1626 = vadd.f32 %v1448, %v1625
        %v1627 = vpop.f32.mrb[0].mxu0
        %1628 = vmatprep.mubr.f32.mxu0 %v1470
        %1629 = vmatmul.mubr.f32.gmra.mrb[0].mxu0 %v1403
        %v1630 = vpop.f32.mrb[0].mxu0
        %v1631 = vadd.f32 %v1448, %v1630
        %v1632 = vpop.f32.mrb[0].mxu0
        %1633 = vmatprep.mubr.f32.mxu0 %v1472
        %1634 = vmatmul.mubr.f32.gmra.mrb[0].mxu0 %v1404
        %v1635 = vpop.f32.mrb[0].mxu0
        %v1636 = vadd.f32 %v1448, %v1635
        %v1637 = vpop.f32.mrb[0].mxu0
        %1638 = vmatprep.mubr.f32.mxu0 %v1474
        %1639 = vmatmul.mubr.f32.gmra.mrb[0].mxu0 %v1405
        %v1640 = vpop.f32.mrb[0].mxu0
        %v1641 = vadd.f32 %v1448, %v1640
        %v1642 = vpop.f32.mrb[0].mxu0
        %1643 = vmatprep.mubr.f32.mxu0 %v1476
        %1644 = vmatmul.mubr.f32.gmra.mrb[0].mxu0 %v1406
        %v1645 = vpop.f32.mrb[0].mxu0
        %v1646 = vadd.f32 %v1448, %v1645
        %v1647 = vpop.f32.mrb[0].mxu0
        %1648 = vmatprep.mubr.f32.mxu0 %v1478
        %1649 = vmatmul.mubr.f32.gmra.mrb[0].mxu0 %v1407
        %v1650 = vpop.f32.mrb[0].mxu0
        %v1651 = vadd.f32 %v1448, %v1650
        %v1652 = vpop.f32.mrb[0].mxu0
        %1653 = vmatprep.mubr.f32.mxu0 %v1480
        %1654 = vmatmul.mubr.f32.gmra.mrb[0].mxu0 %v1408
        %v1655 = vpop.f32.mrb[0].mxu0
        %v1656 = vadd.f32 %v1448, %v1655
        %v1657 = vpop.f32.mrb[0].mxu0
        %1658 = vmatprep.mubr.f32.mxu0 %v1482
        %1659 = vmatmul.mubr.f32.gmra.mrb[0].mxu0 %v1409
        %v1660 = vpop.f32.mrb[0].mxu0
        %v1661 = vadd.f32 %v1448, %v1660
        %v1662 = vpop.f32.mrb[0].mxu0
        %1663 = vmatprep.mubr.f32.mxu0 %v1484
        %1664 = vmatmul.mubr.f32.gmra.mrb[0].mxu0 %v1410
        %v1665 = vpop.f32.mrb[0].mxu0
        %v1666 = vadd.f32 %v1448, %v1665
        %v1667 = vpop.f32.mrb[0].mxu0
        %1668 = vmatprep.mubr.f32.mxu0 %v1486
        %1669 = vmatmul.mubr.f32.gmra.mrb[0].mxu0 %v1411
        %v1670 = vpop.f32.mrb[0].mxu0
        %v1671 = vadd.f32 %v1448, %v1670
        %v1672 = vpop.f32.mrb[0].mxu0
        %1673 = vmatprep.mubr.f32.mxu0 %v1488
        %1674 = vmatmul.mubr.f32.gmra.mrb[0].mxu0 %v1412
        %v1675 = vpop.f32.mrb[0].mxu0
        %v1676 = vadd.f32 %v1448, %v1675
        %v1677 = vpop.f32.mrb[0].mxu0
        %1678 = vmatprep.mubr.f32.mxu0 %v1490
        %1679 = vmatmul.mubr.f32.gmra.mrb[0].mxu0 %v1413
        %v1680 = vpop.f32.mrb[0].mxu0
        %v1681 = vadd.f32 %v1448, %v1680
        %v1682 = vpop.f32.mrb[0].mxu0
        %1683 = vmatprep.mubr.f32.mxu0 %v1492
        %1684 = vmatmul.mubr.f32.gmra.mrb[0].mxu0 %v1414
        %v1685 = vpop.f32.mrb[0].mxu0
        %v1686 = vadd.f32 %v1448, %v1685
        %v1687 = vpop.f32.mrb[0].mxu0
        %1688 = vmatprep.mubr.f32.mxu0 %v1494
        %1689 = vmatmul.mubr.f32.gmra.mrb[0].mxu0 %v1415
        %v1690 = vpop.f32.mrb[0].mxu0
        %v1691 = vadd.f32 %v1448, %v1690
        %v1692 = vpop.f32.mrb[0].mxu0
        %1693 = vmatprep.mubr.f32.mxu0 %v1496
        %1694 = vmatmul.mubr.f32.gmra.mrb[0].mxu0 %v1416
        %v1695 = vpop.f32.mrb[0].mxu0
        %v1696 = vadd.f32 %v1448, %v1695
        %v1697 = vpop.f32.mrb[0].mxu0
        %1698 = vmatprep.mubr.f32.mxu0 %v1498
        %1699 = vmatmul.mubr.f32.gmra.mrb[0].mxu0 %v1417
        %v1700 = vpop.f32.mrb[0].mxu0
        %v1701 = vadd.f32 %v1448, %v1700
        %v1702 = vpop.f32.mrb[0].mxu0
        %1703 = vmatprep.mubr.f32.mxu0 %v1500
        %1704 = vmatmul.mubr.f32.gmra.mrb[0].mxu0 %v1418
        %v1705 = vpop.f32.mrb[0].mxu0
        %v1706 = vadd.f32 %v1448, %v1705
        %v1707 = vpop.f32.mrb[0].mxu0
        %1708 = vmatprep.mubr.f32.mxu0 %v1502
        %1709 = vmatmul.mubr.f32.gmra.mrb[0].mxu0 %v1419
        %v1710 = vpop.f32.mrb[0].mxu0
        %v1711 = vadd.f32 %v1448, %v1710
        %v1712 = vpop.f32.mrb[0].mxu0
        %1713 = vmatprep.mubr.f32.mxu0 %v1504
        %1714 = vmatmul.mubr.f32.gmra.mrb[0].mxu0 %v1420
        %v1715 = vpop.f32.mrb[0].mxu0
        %v1716 = vadd.f32 %v1448, %v1715
        %v1717 = vpop.f32.mrb[0].mxu0
        %1718 = vmatprep.mubr.f32.mxu0 %v1506
        %1719 = vmatmul.mubr.f32.gmra.mrb[0].mxu0 %v1421
        %v1720 = vpop.f32.mrb[0].mxu0
        %v1721 = vadd.f32 %v1448, %v1720
        %v1722 = vpop.f32.mrb[0].mxu0
        %1723 = vmatprep.mubr.f32.mxu0 %v1508
        %1724 = vmatmul.mubr.f32.gmra.mrb[0].mxu0 %v1422
        %v1725 = vpop.f32.mrb[0].mxu0
        %v1726 = vadd.f32 %v1448, %v1725
        %v1727 = vpop.f32.mrb[0].mxu0
        %1728 = vmatprep.mubr.f32.mxu0 %v1510
        %1729 = vmatmul.mubr.f32.gmra.mrb[0].mxu0 %v1423
        %v1730 = vpop.f32.mrb[0].mxu0
        %v1731 = vadd.f32 %v1448, %v1730
        %v1732 = vpop.f32.mrb[0].mxu0
        %1733 = vmatprep.mubr.f32.mxu0 %v1512
        %1734 = vmatmul.mubr.f32.gmra.mrb[0].mxu0 %v1424
        %v1735 = vpop.f32.mrb[0].mxu0
        %v1736 = vadd.f32 %v1448, %v1735
        %v1737 = vpop.f32.mrb[0].mxu0
        %1738 = vdwg.mxu0
        %v1739 = vxor.u32 %v1581, 2147483648
        %v1740 = vxor.u32 %v1586, 2147483648
        %v1741 = vxor.u32 %v1591, 2147483648
        %v1742 = vxor.u32 %v1596, 2147483648
        %v1743 = vxor.u32 %v1601, 2147483648
        %v1744 = vxor.u32 %v1606, 2147483648
        %v1745 = vxor.u32 %v1611, 2147483648
        %v1746 = vxor.u32 %v1616, 2147483648
        %v1747 = vxor.u32 %v1621, 2147483648
        %v1748 = vxor.u32 %v1626, 2147483648
        %v1749 = vxor.u32 %v1631, 2147483648
        %v1750 = vxor.u32 %v1636, 2147483648
        %v1751 = vxor.u32 %v1641, 2147483648
        %v1752 = vxor.u32 %v1646, 2147483648
        %v1753 = vxor.u32 %v1651, 2147483648
        %v1754 = vxor.u32 %v1656, 2147483648
        %v1755 = vxor.u32 %v1661, 2147483648
        %v1756 = vxor.u32 %v1666, 2147483648
        %v1757 = vxor.u32 %v1671, 2147483648
        %v1758 = vxor.u32 %v1676, 2147483648
        %v1759 = vxor.u32 %v1681, 2147483648
        %v1760 = vxor.u32 %v1686, 2147483648
        %v1761 = vxor.u32 %v1691, 2147483648
        %v1762 = vxor.u32 %v1696, 2147483648
        %v1763 = vxor.u32 %v1701, 2147483648
        %v1764 = vxor.u32 %v1706, 2147483648
        %v1765 = vxor.u32 %v1711, 2147483648
        %v1766 = vxor.u32 %v1716, 2147483648
        %v1767 = vxor.u32 %v1721, 2147483648
        %v1768 = vxor.u32 %v1726, 2147483648
        %v1769 = vxor.u32 %v1731, 2147483648
        %v1770 = vxor.u32 %v1736, 2147483648
        %v1771 = vmul.f32 %v1739, 1.442695
        %v1772 = vpow.pop %v1771
        %v1773 = vmul.f32 %v1740, 1.442695
        %v1774 = vpow.pop %v1773
        %v1775 = vmul.f32 %v1741, 1.442695
        %v1776 = vpow.pop %v1775
        %v1777 = vmul.f32 %v1742, 1.442695
        %v1778 = vpow.pop %v1777
        %v1779 = vmul.f32 %v1743, 1.442695
        %v1780 = vpow.pop %v1779
        %v1781 = vmul.f32 %v1744, 1.442695
        %v1782 = vpow.pop %v1781
        %v1783 = vmul.f32 %v1745, 1.442695
        %v1784 = vpow.pop %v1783
        %v1785 = vmul.f32 %v1746, 1.442695
        %v1786 = vpow.pop %v1785
        %v1787 = vmul.f32 %v1747, 1.442695
        %v1788 = vpow.pop %v1787
        %v1789 = vmul.f32 %v1748, 1.442695
        %v1790 = vpow.pop %v1789
        %v1791 = vmul.f32 %v1749, 1.442695
        %v1792 = vpow.pop %v1791
        %v1793 = vmul.f32 %v1750, 1.442695
        %v1794 = vpow.pop %v1793
        %v1795 = vmul.f32 %v1751, 1.442695
        %v1796 = vpow.pop %v1795
        %v1797 = vmul.f32 %v1752, 1.442695
        %v1798 = vpow.pop %v1797
        %v1799 = vmul.f32 %v1753, 1.442695
        %v1800 = vpow.pop %v1799
        %v1801 = vmul.f32 %v1754, 1.442695
        %v1802 = vpow.pop %v1801
        %v1803 = vmul.f32 %v1755, 1.442695
        %v1804 = vpow.pop %v1803
        %v1805 = vmul.f32 %v1756, 1.442695
        %v1806 = vpow.pop %v1805
        %v1807 = vmul.f32 %v1757, 1.442695
        %v1808 = vpow.pop %v1807
        %v1809 = vmul.f32 %v1758, 1.442695
        %v1810 = vpow.pop %v1809
        %v1811 = vmul.f32 %v1759, 1.442695
        %v1812 = vpow.pop %v1811
        %v1813 = vmul.f32 %v1760, 1.442695
        %v1814 = vpow.pop %v1813
        %v1815 = vmul.f32 %v1761, 1.442695
        %v1816 = vpow.pop %v1815
        %v1817 = vmul.f32 %v1762, 1.442695
        %v1818 = vpow.pop %v1817
        %v1819 = vmul.f32 %v1763, 1.442695
        %v1820 = vpow.pop %v1819
        %v1821 = vmul.f32 %v1764, 1.442695
        %v1822 = vpow.pop %v1821
        %v1823 = vmul.f32 %v1765, 1.442695
        %v1824 = vpow.pop %v1823
        %v1825 = vmul.f32 %v1766, 1.442695
        %v1826 = vpow.pop %v1825
        %v1827 = vmul.f32 %v1767, 1.442695
        %v1828 = vpow.pop %v1827
        %v1829 = vmul.f32 %v1768, 1.442695
        %v1830 = vpow.pop %v1829
        %v1831 = vmul.f32 %v1769, 1.442695
        %v1832 = vpow.pop %v1831
        %v1833 = vmul.f32 %v1770, 1.442695
        %v1834 = vpow.pop %v1833
        %v1835 = vadd.f32 %v1772, 1.0
        %v1836 = vadd.f32 %v1774, 1.0
        %v1837 = vadd.f32 %v1776, 1.0
        %v1838 = vadd.f32 %v1778, 1.0
        %v1839 = vadd.f32 %v1780, 1.0
        %v1840 = vadd.f32 %v1782, 1.0
        %v1841 = vadd.f32 %v1784, 1.0
        %v1842 = vadd.f32 %v1786, 1.0
        %v1843 = vadd.f32 %v1788, 1.0
        %v1844 = vadd.f32 %v1790, 1.0
        %v1845 = vadd.f32 %v1792, 1.0
        %v1846 = vadd.f32 %v1794, 1.0
        %v1847 = vadd.f32 %v1796, 1.0
        %v1848 = vadd.f32 %v1798, 1.0
        %v1849 = vadd.f32 %v1800, 1.0
        %v1850 = vadd.f32 %v1802, 1.0
        %v1851 = vadd.f32 %v1804, 1.0
        %v1852 = vadd.f32 %v1806, 1.0
        %v1853 = vadd.f32 %v1808, 1.0
        %v1854 = vadd.f32 %v1810, 1.0
        %v1855 = vadd.f32 %v1812, 1.0
        %v1856 = vadd.f32 %v1814, 1.0
        %v1857 = vadd.f32 %v1816, 1.0
        %v1858 = vadd.f32 %v1818, 1.0
        %v1859 = vadd.f32 %v1820, 1.0
        %v1860 = vadd.f32 %v1822, 1.0
        %v1861 = vadd.f32 %v1824, 1.0
        %v1862 = vadd.f32 %v1826, 1.0
        %v1863 = vadd.f32 %v1828, 1.0
        %v1864 = vadd.f32 %v1830, 1.0
        %v1865 = vadd.f32 %v1832, 1.0
        %v1866 = vadd.f32 %v1834, 1.0
        %v1867 = vrcp.pop %v1835
        %v1868 = vmul.f32 1.0, %v1867
        %v1869 = vrcp.pop %v1836
        %v1870 = vmul.f32 1.0, %v1869
        %v1871 = vrcp.pop %v1837
        %v1872 = vmul.f32 1.0, %v1871
        %v1873 = vrcp.pop %v1838
        %v1874 = vmul.f32 1.0, %v1873
        %v1875 = vrcp.pop %v1839
        %v1876 = vmul.f32 1.0, %v1875
        %v1877 = vrcp.pop %v1840
        %v1878 = vmul.f32 1.0, %v1877
        %v1879 = vrcp.pop %v1841
        %v1880 = vmul.f32 1.0, %v1879
        %v1881 = vrcp.pop %v1842
        %v1882 = vmul.f32 1.0, %v1881
        %v1883 = vrcp.pop %v1843
        %v1884 = vmul.f32 1.0, %v1883
        %v1885 = vrcp.pop %v1844
        %v1886 = vmul.f32 1.0, %v1885
        %v1887 = vrcp.pop %v1845
        %v1888 = vmul.f32 1.0, %v1887
        %v1889 = vrcp.pop %v1846
        %v1890 = vmul.f32 1.0, %v1889
        %v1891 = vrcp.pop %v1847
        %v1892 = vmul.f32 1.0, %v1891
        %v1893 = vrcp.pop %v1848
        %v1894 = vmul.f32 1.0, %v1893
        %v1895 = vrcp.pop %v1849
        %v1896 = vmul.f32 1.0, %v1895
        %v1897 = vrcp.pop %v1850
        %v1898 = vmul.f32 1.0, %v1897
        %v1899 = vrcp.pop %v1851
        %v1900 = vmul.f32 1.0, %v1899
        %v1901 = vrcp.pop %v1852
        %v1902 = vmul.f32 1.0, %v1901
        %v1903 = vrcp.pop %v1853
        %v1904 = vmul.f32 1.0, %v1903
        %v1905 = vrcp.pop %v1854
        %v1906 = vmul.f32 1.0, %v1905
        %v1907 = vrcp.pop %v1855
        %v1908 = vmul.f32 1.0, %v1907
        %v1909 = vrcp.pop %v1856
        %v1910 = vmul.f32 1.0, %v1909
        %v1911 = vrcp.pop %v1857
        %v1912 = vmul.f32 1.0, %v1911
        %v1913 = vrcp.pop %v1858
        %v1914 = vmul.f32 1.0, %v1913
        %v1915 = vrcp.pop %v1859
        %v1916 = vmul.f32 1.0, %v1915
        %v1917 = vrcp.pop %v1860
        %v1918 = vmul.f32 1.0, %v1917
        %v1919 = vrcp.pop %v1861
        %v1920 = vmul.f32 1.0, %v1919
        %v1921 = vrcp.pop %v1862
        %v1922 = vmul.f32 1.0, %v1921
        %v1923 = vrcp.pop %v1863
        %v1924 = vmul.f32 1.0, %v1923
        %v1925 = vrcp.pop %v1864
        %v1926 = vmul.f32 1.0, %v1925
        %v1927 = vrcp.pop %v1865
        %v1928 = vmul.f32 1.0, %v1927
        %v1929 = vrcp.pop %v1866
        %v1930 = vmul.f32 1.0, %v1929
        %v1931 = vmul.f32 %v1581, %v1868
        %v1932 = vmul.f32 %v1586, %v1870
        %v1933 = vmul.f32 %v1591, %v1872
        %v1934 = vmul.f32 %v1596, %v1874
        %v1935 = vmul.f32 %v1601, %v1876
        %v1936 = vmul.f32 %v1606, %v1878
        %v1937 = vmul.f32 %v1611, %v1880
        %v1938 = vmul.f32 %v1616, %v1882
        %v1939 = vmul.f32 %v1621, %v1884
        %v1940 = vmul.f32 %v1626, %v1886
        %v1941 = vmul.f32 %v1631, %v1888
        %v1942 = vmul.f32 %v1636, %v1890
        %v1943 = vmul.f32 %v1641, %v1892
        %v1944 = vmul.f32 %v1646, %v1894
        %v1945 = vmul.f32 %v1651, %v1896
        %v1946 = vmul.f32 %v1656, %v1898
        %v1947 = vmul.f32 %v1661, %v1900
        %v1948 = vmul.f32 %v1666, %v1902
        %v1949 = vmul.f32 %v1671, %v1904
        %v1950 = vmul.f32 %v1676, %v1906
        %v1951 = vmul.f32 %v1681, %v1908
        %v1952 = vmul.f32 %v1686, %v1910
        %v1953 = vmul.f32 %v1691, %v1912
        %v1954 = vmul.f32 %v1696, %v1914
        %v1955 = vmul.f32 %v1701, %v1916
        %v1956 = vmul.f32 %v1706, %v1918
        %v1957 = vmul.f32 %v1711, %v1920
        %v1958 = vmul.f32 %v1716, %v1922
        %v1959 = vmul.f32 %v1721, %v1924
        %v1960 = vmul.f32 %v1726, %v1926
        %v1961 = vmul.f32 %v1731, %v1928
        %v1962 = vmul.f32 %v1736, %v1930
        %1963 = vst.msk [vmem:[%s207] sm:$0xff] %vm1293, %v1931
        %1964 = vst.msk [vmem:[%s207 + $0x8] sm:$0xff] %vm1293, %v1932
        %1965 = vst.msk [vmem:[%s207 + $0x10] sm:$0xff] %vm1293, %v1933
        %1966 = vst.msk [vmem:[%s207 + $0x18] sm:$0xff] %vm1293, %v1934
        %1967 = vst.msk [vmem:[%s207 + $0x20] sm:$0xff] %vm1293, %v1935
        %1968 = vst.msk [vmem:[%s207 + $0x28] sm:$0xff] %vm1293, %v1936
        %1969 = vst.msk [vmem:[%s207 + $0x30] sm:$0xff] %vm1293, %v1937
        %1970 = vst.msk [vmem:[%s207 + $0x38] sm:$0xff] %vm1293, %v1938
        %1971 = vst.msk [vmem:[%s207 + $0x40] sm:$0xff] %vm1293, %v1939
        %1972 = vst.msk [vmem:[%s207 + $0x48] sm:$0xff] %vm1293, %v1940
        %1973 = vst.msk [vmem:[%s207 + $0x50] sm:$0xff] %vm1293, %v1941
        %1974 = vst.msk [vmem:[%s207 + $0x58] sm:$0xff] %vm1293, %v1942
        %1975 = vst.msk [vmem:[%s207 + $0x60] sm:$0xff] %vm1293, %v1943
        %1976 = vst.msk [vmem:[%s207 + $0x68] sm:$0xff] %vm1293, %v1944
        %1977 = vst.msk [vmem:[%s207 + $0x70] sm:$0xff] %vm1293, %v1945
        %1978 = vst.msk [vmem:[%s207 + $0x78] sm:$0xff] %vm1293, %v1946
        %1979 = vst.msk [vmem:[%s207 + $0x80] sm:$0xff] %vm1293, %v1947
        %1980 = vst.msk [vmem:[%s207 + $0x88] sm:$0xff] %vm1293, %v1948
        %1981 = vst.msk [vmem:[%s207 + $0x90] sm:$0xff] %vm1293, %v1949
        %1982 = vst.msk [vmem:[%s207 + $0x98] sm:$0xff] %vm1293, %v1950
        %1983 = vst.msk [vmem:[%s207 + $0xa0] sm:$0xff] %vm1293, %v1951
        %1984 = vst.msk [vmem:[%s207 + $0xa8] sm:$0xff] %vm1293, %v1952
        %1985 = vst.msk [vmem:[%s207 + $0xb0] sm:$0xff] %vm1293, %v1953
        %1986 = vst.msk [vmem:[%s207 + $0xb8] sm:$0xff] %vm1293, %v1954
        %1987 = vst.msk [vmem:[%s207 + $0xc0] sm:$0xff] %vm1293, %v1955
        %1988 = vst.msk [vmem:[%s207 + $0xc8] sm:$0xff] %vm1293, %v1956
        %1989 = vst.msk [vmem:[%s207 + $0xd0] sm:$0xff] %vm1293, %v1957
        %1990 = vst.msk [vmem:[%s207 + $0xd8] sm:$0xff] %vm1293, %v1958
        %1991 = vst.msk [vmem:[%s207 + $0xe0] sm:$0xff] %vm1293, %v1959
        %1992 = vst.msk [vmem:[%s207 + $0xe8] sm:$0xff] %vm1293, %v1960
        %1993 = vst.msk [vmem:[%s207 + $0xf0] sm:$0xff] %vm1293, %v1961
        %1994 = vst.msk [vmem:[%s207 + $0xf8] sm:$0xff] %vm1293, %v1962
        %2027 = vrot.lane.b32.xlu0 %v1931, 64
        %v2028 = vpop.permute.xlu0 %2027
        %2029 = vrot.lane.b32.xlu0 %v1932, 64
        %v2030 = vpop.permute.xlu0 %2029
        %2031 = vrot.lane.b32.xlu0 %v1933, 64
        %v2032 = vpop.permute.xlu0 %2031
        %2033 = vrot.lane.b32.xlu0 %v1934, 64
        %v2034 = vpop.permute.xlu0 %2033
        %2035 = vrot.lane.b32.xlu0 %v1935, 64
        %v2036 = vpop.permute.xlu0 %2035
        %2037 = vrot.lane.b32.xlu0 %v1936, 64
        %v2038 = vpop.permute.xlu0 %2037
        %2039 = vrot.lane.b32.xlu0 %v1937, 64
        %v2040 = vpop.permute.xlu0 %2039
        %2041 = vrot.lane.b32.xlu0 %v1938, 64
        %v2042 = vpop.permute.xlu0 %2041
        %2043 = vrot.lane.b32.xlu0 %v1939, 64
        %v2044 = vpop.permute.xlu0 %2043
        %2045 = vrot.lane.b32.xlu0 %v1940, 64
        %v2046 = vpop.permute.xlu0 %2045
        %2047 = vrot.lane.b32.xlu0 %v1941, 64
        %v2048 = vpop.permute.xlu0 %2047
        %2049 = vrot.lane.b32.xlu0 %v1942, 64
        %v2050 = vpop.permute.xlu0 %2049
        %2051 = vrot.lane.b32.xlu0 %v1943, 64
        %v2052 = vpop.permute.xlu0 %2051
        %2053 = vrot.lane.b32.xlu0 %v1944, 64
        %v2054 = vpop.permute.xlu0 %2053
        %2055 = vrot.lane.b32.xlu0 %v1945, 64
        %v2056 = vpop.permute.xlu0 %2055
        %2057 = vrot.lane.b32.xlu0 %v1946, 64
        %v2058 = vpop.permute.xlu0 %2057
        %2059 = vrot.lane.b32.xlu0 %v1947, 64
        %v2060 = vpop.permute.xlu0 %2059
        %2061 = vrot.lane.b32.xlu0 %v1948, 64
        %v2062 = vpop.permute.xlu0 %2061
        %2063 = vrot.lane.b32.xlu0 %v1949, 64
        %v2064 = vpop.permute.xlu0 %2063
        %2065 = vrot.lane.b32.xlu0 %v1950, 64
        %v2066 = vpop.permute.xlu0 %2065
        %2067 = vrot.lane.b32.xlu0 %v1951, 64
        %v2068 = vpop.permute.xlu0 %2067
        %2069 = vrot.lane.b32.xlu0 %v1952, 64
        %v2070 = vpop.permute.xlu0 %2069
        %2071 = vrot.lane.b32.xlu0 %v1953, 64
        %v2072 = vpop.permute.xlu0 %2071
        %2073 = vrot.lane.b32.xlu0 %v1954, 64
        %v2074 = vpop.permute.xlu0 %2073
        %2075 = vrot.lane.b32.xlu0 %v1955, 64
        %v2076 = vpop.permute.xlu0 %2075
        %2077 = vrot.lane.b32.xlu0 %v1956, 64
        %v2078 = vpop.permute.xlu0 %2077
        %2079 = vrot.lane.b32.xlu0 %v1957, 64
        %v2080 = vpop.permute.xlu0 %2079
        %2081 = vrot.lane.b32.xlu0 %v1958, 64
        %v2082 = vpop.permute.xlu0 %2081
        %2083 = vrot.lane.b32.xlu0 %v1959, 64
        %v2084 = vpop.permute.xlu0 %2083
        %2085 = vrot.lane.b32.xlu0 %v1960, 64
        %v2086 = vpop.permute.xlu0 %2085
        %2087 = vrot.lane.b32.xlu0 %v1961, 64
        %v2088 = vpop.permute.xlu0 %2087
        %2089 = vrot.lane.b32.xlu0 %v1962, 64
        %v2090 = vpop.permute.xlu0 %2089
        %2123 = vst.msk [vmem:[%s235] sm:$0xff] %vm1194, %v2028
        %2124 = vst.msk [vmem:[%s235 + $0x8] sm:$0xff] %vm1194, %v2030
        %2125 = vst.msk [vmem:[%s235 + $0x10] sm:$0xff] %vm1194, %v2032
        %2126 = vst.msk [vmem:[%s235 + $0x18] sm:$0xff] %vm1194, %v2034
        %2127 = vst.msk [vmem:[%s235 + $0x20] sm:$0xff] %vm1194, %v2036
        %2128 = vst.msk [vmem:[%s235 + $0x28] sm:$0xff] %vm1194, %v2038
        %2129 = vst.msk [vmem:[%s235 + $0x30] sm:$0xff] %vm1194, %v2040
        %2130 = vst.msk [vmem:[%s235 + $0x38] sm:$0xff] %vm1194, %v2042
        %2131 = vst.msk [vmem:[%s235 + $0x40] sm:$0xff] %vm1194, %v2044
        %2132 = vst.msk [vmem:[%s235 + $0x48] sm:$0xff] %vm1194, %v2046
        %2133 = vst.msk [vmem:[%s235 + $0x50] sm:$0xff] %vm1194, %v2048
        %2134 = vst.msk [vmem:[%s235 + $0x58] sm:$0xff] %vm1194, %v2050
        %2135 = vst.msk [vmem:[%s235 + $0x60] sm:$0xff] %vm1194, %v2052
        %2136 = vst.msk [vmem:[%s235 + $0x68] sm:$0xff] %vm1194, %v2054
        %2137 = vst.msk [vmem:[%s235 + $0x70] sm:$0xff] %vm1194, %v2056
        %2138 = vst.msk [vmem:[%s235 + $0x78] sm:$0xff] %vm1194, %v2058
        %2139 = vst.msk [vmem:[%s235 + $0x80] sm:$0xff] %vm1194, %v2060
        %2140 = vst.msk [vmem:[%s235 + $0x88] sm:$0xff] %vm1194, %v2062
        %2141 = vst.msk [vmem:[%s235 + $0x90] sm:$0xff] %vm1194, %v2064
        %2142 = vst.msk [vmem:[%s235 + $0x98] sm:$0xff] %vm1194, %v2066
        %2143 = vst.msk [vmem:[%s235 + $0xa0] sm:$0xff] %vm1194, %v2068
        %2144 = vst.msk [vmem:[%s235 + $0xa8] sm:$0xff] %vm1194, %v2070
        %2145 = vst.msk [vmem:[%s235 + $0xb0] sm:$0xff] %vm1194, %v2072
        %2146 = vst.msk [vmem:[%s235 + $0xb8] sm:$0xff] %vm1194, %v2074
        %2147 = vst.msk [vmem:[%s235 + $0xc0] sm:$0xff] %vm1194, %v2076
        %2148 = vst.msk [vmem:[%s235 + $0xc8] sm:$0xff] %vm1194, %v2078
        %2149 = vst.msk [vmem:[%s235 + $0xd0] sm:$0xff] %vm1194, %v2080
        %2150 = vst.msk [vmem:[%s235 + $0xd8] sm:$0xff] %vm1194, %v2082
        %2151 = vst.msk [vmem:[%s235 + $0xe0] sm:$0xff] %vm1194, %v2084
        %2152 = vst.msk [vmem:[%s235 + $0xe8] sm:$0xff] %vm1194, %v2086
        %2153 = vst.msk [vmem:[%s235 + $0xf0] sm:$0xff] %vm1194, %v2088
        %2154 = vst.msk [vmem:[%s235 + $0xf8] sm:$0xff] %vm1194, %v2090
        %s2155 = sand.u32 %s109, 1
        %s2156 = scalar_lea.sflag [#allocation3], %s2155
        %s2157 = sand.u32 %s109, 1
        %s2158 = smul.addr %s2157, 256
        %s2159 = scalar_lea.vmem [#allocation2], %s2158
        %s2160 = smul.u32 8, %s24
        %p2161 = scmp.lt.s32.totalorder %s23, 1
        %s2162 = scalar_select %p2161, %s23, 1
        %p2163 = scmp.lt.s32.totalorder %s2160, 31
        %s2164 = scalar_select %p2163, %s2160, 31
        %s2165 = smul.addr %s2164, 4
        %s2166 = smul.addr %s2162, 128
        %s2167 = sadd.s32 %s2165, %s2166
        %s2168 = smul.addr %s2167, 8
        %s2169 = scalar_lea.vmem %s4, %s2168
        // Predicated region
        $region33: #{tpu_custom_call.1} parent=31 // pred_check
          %p2170 = pneg %p119
        $region34: #{tpu_custom_call.1} parent=31 // pred_check_branch
          %2172 = sbr.rel (%p2170) target = $region36
        $region35: #{tpu_custom_call.1} parent=31 // pred_region
          %s2173 = smul.u32 8, %s24
          %s2175 = ssub.s32 4096, 4096
          %2176 = vsyncadd %s2156, %s2175
          %s2177 = smul.addr %s2173, 4
          %s2178 = smul.addr %s23, 128
          %s2179 = sadd.s32 %s2177, %s2178
          %s2180 = smul.addr %s2179, 128
          %s2181 = scalar_lea.hbm %s3, %s2180
          %s2182 = sshll.u32 %s2159, 4
          %s2183 = int_to_ptr.vmem [resolvable:$true] %s2182
          %2188 = dma.vmem_to_hbm [thread:$0]  %s2183, 4096, %s2181, %s2156, 128, 128, 8
        $region36: #{tpu_custom_call.1} parent=31 // pred_fallthru
          _
        // Predicated region
        $region37: #{tpu_custom_call.1} parent=31 // pred_check
          %p2189 = pneg %p147
        $region38: #{tpu_custom_call.1} parent=31 // pred_check_branch
          %2191 = sbr.rel (%p2189) target = $region40
        $region39: #{tpu_custom_call.1} parent=31 // pred_region
          %s2192 = smul.u32 8, %s24
        $region40: #{tpu_custom_call.1} parent=31 // pred_fallthru
          _
      $region32: #{tpu_custom_call.1} parent=5 // pred_fallthru
        _
      %p2193 = scmp.le.s32.totalorder 2, %s14
      // Predicated region
      $region41: #{tpu_custom_call.1} parent=5 // pred_check
        %p2194 = pneg %p2193
      $region42: #{tpu_custom_call.1} parent=5 // pred_check_branch
        %2196 = sbr.rel (%p2194) target = $region44
      $region43: #{tpu_custom_call.1} parent=5 // pred_region
        %s2197 = ssub.s32 %s14, 2
        // Predicated region
        $region45: #{tpu_custom_call.1} parent=43 // pred_check
          %p2198 = pneg %p125
        $region46: #{tpu_custom_call.1} parent=43 // pred_check_branch
          %2200 = sbr.rel (%p2198) target = $region48
        $region47: #{tpu_custom_call.1} parent=43 // pred_region
          %s2201 = sand.u32 %s110, 1
          %s2202 = scalar_lea.sflag [#allocation3], %s2201
          %s2203 = sand.u32 %s110, 1
          %s2204 = smul.addr %s2203, 256
          %s2205 = scalar_lea.vmem [#allocation2], %s2204
          %2206 = dma.done %s2202, 4096
        $region48: #{tpu_custom_call.1} parent=43 // pred_fallthru
          _
        // Predicated region
        $region49: #{tpu_custom_call.1} parent=43 // pred_check
          %p2207 = pneg %p153
        $region50: #{tpu_custom_call.1} parent=43 // pred_check_branch
          %2209 = sbr.rel (%p2207) target = $region52
        $region51: #{tpu_custom_call.1} parent=43 // pred_region
          %s2210 = smul.u32 8, %s26
          %p2211 = scmp.lt.s32.totalorder %s25, 1
          %s2212 = scalar_select %p2211, %s25, 1
          %p2213 = scmp.lt.s32.totalorder %s2210, 31
          %s2214 = scalar_select %p2213, %s2210, 31
          %s2215 = smul.addr %s2214, 4
          %s2216 = smul.addr %s2212, 128
          %s2217 = sadd.s32 %s2215, %s2216
          %s2218 = smul.addr %s2217, 8
          %s2219 = scalar_lea.vmem %s4, %s2218
        $region52: #{tpu_custom_call.1} parent=43 // pred_fallthru
          _
      $region44: #{tpu_custom_call.1} parent=5 // pred_fallthru
        _
    $region6: #{tpu_custom_call.1} parent=1 // loop_footer
      %s18 = sadd.s32 1, %s14
    $region7: #{tpu_custom_call.1} parent=1 // loop_footer_branch
      %13 = sbr.rel target = $region3
    $region8: #{tpu_custom_call.1} parent=1 // loop_exit
      _
    %2220 = vsyncpa [#allocation3], 1
    %s2221 = scalar_lea.sflag [#allocation3], 1
    %2222 = vsyncpa %s2221, 1

</llo_original>
